<compile_context>
chip_gen: v5e
topology: v5e:2x2
jax: 0.10.0
libtpu: 0.0.40
codegen_flags: <defaults>
</compile_context>

<pallas_src>
import numpy as np
import jax
import jax.numpy as jnp
from jax.experimental import pallas as pl
from jax.experimental.pallas import tpu as pltpu

# ----------------------- shapes implied by the module ---------------------------
B = 2                                   # batch
C_IN, L_IN = 8, 240                     # discriminator input (B, 8, 240)
C_OUT, K, STRIDE = 16, 8, 2             # Conv1d(8 -> 16, k=8, s=2)
L_CONV = (L_IN - K) // STRIDE + 1       # 117
L_POOL = L_CONV // 2                    # 58   (MaxPool1d(2))
N_FLAT = C_OUT * L_POOL                 # 928
N_D1 = 400                              # Linear(928 -> 400)

# kernel-side padded sizes
JP = 64                                 # pooled positions padded 58 -> 64
KF = 128                                # im2col features padded 81 -> 128
N_D1P = 512                             # 400 -> 512 lanes
N_FLATP = 1024                          # flattened features padded 928 -> 1024
N_OUTP = 128                            # final scalar padded to 128 lanes


# ------------------------------ Pallas kernel ----------------------------------
def discriminator_kernel(scal_ref, xcol_ref, wc_ref, w1_ref, b1_ref, w2_ref,
                         out_ref):
    # scal_ref : (4,) f32 in SMEM -> [a1 (PReLU1), a2 (PReLU2), b2 (final bias), 0]
    # xcol_ref : (B, 128, 64) bf16, per-batch im2col (feature f, pooled pos j);
    #            feature f = ci*10 + t holds x[b, ci, 4j + t], f = 80 holds 1.0.
    # wc_ref   : (32, 128) bf16 conv weights (+bias column), rows 0..15 = conv at
    #            l=2j, rows 16..31 = conv at l=2j+1.
    # w1_ref   : (1024, 512) bf16, b1_ref: (1, 512) f32, w2_ref: (1, 512) f32.
    a1 = scal_ref[0]
    a2 = scal_ref[1]
    b2 = scal_ref[2]

    bsz = xcol_ref.shape[0]
    wc = wc_ref[...]                                                   # (32, 128)

    flat_rows = []
    for b in range(bsz):                                               # B = 2
        xb = xcol_ref[b]                                               # (128, 64) bf16
        # conv outputs at both positions of every pool window, bias folded in.
        yb = jnp.dot(wc, xb, preferred_element_type=jnp.float32)       # (32, 64) f32
        yb = jnp.where(yb >= 0, yb, a1 * yb)                           # PReLU
        pooled = jnp.maximum(yb[0:16, :], yb[16:32, :])                # MaxPool1d(2): (16, 64)
        # columns >= 58 are junk; they hit all-zero rows of w1 below.

        # Build the lane-dense (1, 1024) flattened activation using only
        # tile-aligned slices + 128-lane-aligned concatenations (no reshapes).
        ab = jnp.concatenate([pooled[0:8, :], pooled[8:16, :]], axis=1)  # (8, 128)
        row = jnp.concatenate([ab[r:r + 1, :] for r in range(8)], axis=1)  # (1, 1024)
        flat_rows.append(row)

    flat = jnp.concatenate(flat_rows, axis=0)                          # (B, 1024) f32

    # Linear(928 -> 400): single K=1024 MXU matmul with M = B.
    h = jnp.dot(flat.astype(jnp.bfloat16), w1_ref[...],
                preferred_element_type=jnp.float32)                    # (B, 512) f32
    h = h + b1_ref[...]
    h = jnp.where(h >= 0, h, a2 * h)                                   # PReLU

    # Linear(400 -> 1): VPU multiply + lane reduction (no MXU, no padded weight).
    logit = jnp.sum(h * w2_ref[...], axis=1, keepdims=True) + b2       # (B, 1)
    out_ref[...] = jnp.broadcast_to(logit, out_ref.shape)              # (B, 128)


# ------------------------------ one-time weight prep ----------------------------
def prepare_params(p):
    """Host-side, one-time conversion of PyTorch-layout params to kernel layout."""
    Wc = np.asarray(p["Wc"], np.float32)       # (16, 8, 8)  (out, in, k)
    bc = np.asarray(p["bconv"], np.float32)    # (16,)
    W1 = np.asarray(p["W1"], np.float32)       # (400, 928)
    b1 = np.asarray(p["b1"], np.float32)       # (400,)
    W2 = np.asarray(p["W2"], np.float32)       # (1, 400)
    b2 = np.asarray(p["b2"], np.float32)       # (1,)

    # Conv weight: feature f = ci*10 + t multiplies x[ci, 4j + t].
    # Row c      -> conv output at l = 2j   (input idx 4j + k,   so t = k).
    # Row 16 + c -> conv output at l = 2j+1 (input idx 4j+2 + k, so t = k + 2).
    # Column 80 (the constant-1 feature) carries the conv bias.
    wcr = np.zeros((32, KF), np.float32)
    for c in range(C_OUT):
        for ci in range(C_IN):
            for k in range(K):
                wcr[c, ci * 10 + k] = Wc[c, ci, k]
                wcr[16 + c, ci * 10 + k + 2] = Wc[c, ci, k]
        wcr[c, 80] = bc[c]
        wcr[16 + c, 80] = bc[c]

    # Linear(928 -> 400) rows permuted to the kernel's flatten order:
    #   lane L -> channel c = (L // 128) + 8 * ((L % 128) // 64), position j = L % 64
    # Positions j >= 58 map to zero rows (mask the padded pool columns).
    W1r = np.zeros((N_FLATP, N_D1P), np.float32)
    for L in range(N_FLATP):
        r, m = divmod(L, 128)
        c = r + 8 * (m // 64)
        j = m % 64
        if j < L_POOL:
            W1r[L, :N_D1] = W1[:, c * L_POOL + j]
    b1r = np.zeros((1, N_D1P), np.float32)
    b1r[0, :N_D1] = b1

    w2r = np.zeros((1, N_D1P), np.float32)      # Linear(400 -> 1) as a lane vector
    w2r[0, :N_D1] = W2[0, :]

    scal = np.array([p["a1"], p["a2"], b2[0], 0.0], np.float32)   # SMEM scalars

    return dict(wc=jnp.asarray(wcr).astype(jnp.bfloat16),
                w1=jnp.asarray(W1r).astype(jnp.bfloat16),
                b1=jnp.asarray(b1r),
                w2=jnp.asarray(w2r),
                scal=jnp.asarray(scal))


# ------------------------------ forward wrapper ---------------------------------
def discriminator_forward(x, kp):
    Bn = x.shape[0]
    # Build the full im2col in XLA (pure layout plumbing):
    #   xcol[b, ci*10 + t, j] = x[b, ci, 4j + t],  xcol[b, 80, j] = 1.0
    gidx = 4 * np.arange(L_POOL)[:, None] + np.arange(10)[None, :]    # (58, 10)
    patches = x[:, :, gidx]                                           # (B, 8, 58, 10)
    patches = jnp.transpose(patches, (0, 1, 3, 2)).reshape(Bn, 80, L_POOL)
    ones = jnp.ones((Bn, 1, L_POOL), x.dtype)
    xc = jnp.concatenate([patches, ones], axis=1)                     # (B, 81, 58)
    xc = jnp.pad(xc, ((0, 0), (0, KF - 81), (0, JP - L_POOL)))        # (B, 128, 64)
    xcol = xc.astype(jnp.bfloat16)

    out = pl.pallas_call(
        discriminator_kernel,
        out_shape=jax.ShapeDtypeStruct((Bn, N_OUTP), jnp.float32),
        grid=(1,),
        in_specs=[
            pl.BlockSpec(memory_space=pltpu.MemorySpace.SMEM),        # scalars (4,)
            pl.BlockSpec((Bn, KF, JP), lambda i: (0, 0, 0)),          # im2col (bf16)
            pl.BlockSpec((32, KF), lambda i: (0, 0)),                 # conv weight (bf16)
            pl.BlockSpec((N_FLATP, N_D1P), lambda i: (0, 0)),         # Linear1 weight (bf16)
            pl.BlockSpec((1, N_D1P), lambda i: (0, 0)),               # Linear1 bias (f32)
            pl.BlockSpec((1, N_D1P), lambda i: (0, 0)),               # Linear2 weight (f32)
        ],
        out_specs=pl.BlockSpec((Bn, N_OUTP), lambda i: (0, 0)),
        compiler_params=pltpu.CompilerParams(
            dimension_semantics=("arbitrary",)),
    )(kp["scal"], xcol, kp["wc"], kp["w1"], kp["b1"], kp["w2"])
    return out[:, :1]                                                 # (B, 1)


# ------------------------------ numpy reference ---------------------------------
def reference_forward(x, p):
    Wc = np.asarray(p["Wc"], np.float32)
    bc = np.asarray(p["bconv"], np.float32)
    W1 = np.asarray(p["W1"], np.float32)
    b1 = np.asarray(p["b1"], np.float32)
    W2 = np.asarray(p["W2"], np.float32)
    b2 = np.asarray(p["b2"], np.float32)
    a1, a2 = np.float32(p["a1"]), np.float32(p["a2"])
    # the kernel stores the big dense weight in bfloat16; mirror that quantization
    W1q = np.asarray(jnp.asarray(W1).astype(jnp.bfloat16).astype(jnp.float32))

    Bn = x.shape[0]
    y = np.zeros((Bn, C_OUT, L_CONV), np.float32)
    for l in range(L_CONV):
        patch = x[:, :, 2 * l:2 * l + K]                              # (B, 8, 8)
        y[:, :, l] = np.einsum("bck,ock->bo", patch, Wc) + bc
    y = np.where(y >= 0, y, a1 * y)                                   # PReLU
    z = np.maximum(y[:, :, 0:2 * L_POOL:2], y[:, :, 1:2 * L_POOL:2])  # (B, 16, 58)
    v = z.reshape(Bn, N_FLAT)                                         # channel-major flatten
    h = v @ W1q.T + b1
    h = np.where(h >= 0, h, a2 * h)
    return h @ W2.T + b2                                              # (B, 1)


# ------------------------------------ main ---------------------------------------
if __name__ == "__main__":
    key = jax.random.PRNGKey(0)
    kparam, kx = jax.random.split(key)
    ks = jax.random.split(kparam, 6)
    params = dict(
        Wc=np.asarray(jax.random.normal(ks[0], (C_OUT, C_IN, K), jnp.float32) * 0.1),
        bconv=np.asarray(jax.random.normal(ks[1], (C_OUT,), jnp.float32) * 0.1),
        a1=np.float32(0.25),                    # PReLU default init
        W1=np.asarray(jax.random.normal(ks[2], (N_D1, N_FLAT), jnp.float32) * 0.05),
        b1=np.asarray(jax.random.normal(ks[3], (N_D1,), jnp.float32) * 0.1),
        a2=np.float32(0.25),
        W2=np.asarray(jax.random.normal(ks[4], (1, N_D1), jnp.float32) * 0.05),
        b2=np.asarray(jax.random.normal(ks[5], (1,), jnp.float32) * 0.1),
    )
    x = jax.random.normal(kx, (B, C_IN, L_IN), jnp.float32)

    kparams = prepare_params(params)            # one-time host-side weight re-layout
    fwd = jax.jit(discriminator_forward)
    out = jax.block_until_ready(fwd(x, kparams))

    assert out.shape == (B, 1), out.shape
    ref = reference_forward(np.asarray(x), params)
    # tolerance covers bf16 MXU operand/activation truncation (by design)
    np.testing.assert_allclose(np.asarray(out), ref, rtol=2e-2, atol=5e-2)
    print("KERNEL_OK")
</pallas_src>

<mosaic_0001>
module attributes {stable_mosaic.version = 11 : i64} {
  func.func @discriminator_kernel(%arg0: i32, %arg1: memref<4xf32, #tpu.memory_space<smem>>, %arg2: memref<2x128x64xbf16, #tpu.memory_space<vmem>>, %arg3: memref<32x128xbf16, #tpu.memory_space<vmem>>, %arg4: memref<1024x512xbf16, #tpu.memory_space<vmem>>, %arg5: memref<1x512xf32, #tpu.memory_space<vmem>>, %arg6: memref<1x512xf32, #tpu.memory_space<vmem>>, %arg7: memref<2x128xf32, #tpu.memory_space<vmem>>) attributes {dimension_semantics = [#tpu.dimension_semantics<arbitrary>], iteration_bounds = array<i64: 1>, scalar_prefetch = 0 : i64, scratch_operands = 0 : i64, tpu.core_type = #tpu.core_type<tc>, window_params = [{transform_indices = @transform_0, window_bounds = array<i64: 4>}, {pipeline_mode = #tpu.pipeline_mode<synchronous>, transform_indices = @transform_1, window_bounds = array<i64: 2, 128, 64>}, {pipeline_mode = #tpu.pipeline_mode<synchronous>, transform_indices = @transform_2, window_bounds = array<i64: 32, 128>}, {pipeline_mode = #tpu.pipeline_mode<synchronous>, transform_indices = @transform_3, window_bounds = array<i64: 1024, 512>}, {pipeline_mode = #tpu.pipeline_mode<synchronous>, transform_indices = @transform_4, window_bounds = array<i64: 1, 512>}, {pipeline_mode = #tpu.pipeline_mode<synchronous>, transform_indices = @transform_5, window_bounds = array<i64: 1, 512>}, {pipeline_mode = #tpu.pipeline_mode<synchronous>, transform_indices = @transform_6, window_bounds = array<i64: 2, 128>}]} {
    %c0 = arith.constant 0 : index
    %0 = memref.load %arg1[%c0] : memref<4xf32, #tpu.memory_space<smem>>
    %c1 = arith.constant 1 : index
    %1 = memref.load %arg1[%c1] : memref<4xf32, #tpu.memory_space<smem>>
    %c2 = arith.constant 2 : index
    %2 = memref.load %arg1[%c2] : memref<4xf32, #tpu.memory_space<smem>>
    %c0_0 = arith.constant 0 : index
    %c0_1 = arith.constant 0 : index
    %3 = vector.load %arg3[%c0_0, %c0_1] : memref<32x128xbf16, #tpu.memory_space<vmem>>, vector<32x128xbf16>
    %c0_2 = arith.constant 0 : index
    %c0_3 = arith.constant 0 : index
    %c0_4 = arith.constant 0 : index
    %4 = vector.load %arg2[%c0_2, %c0_3, %c0_4] : memref<2x128x64xbf16, #tpu.memory_space<vmem>>, vector<1x128x64xbf16>
    %5 = vector.shape_cast %4 : vector<1x128x64xbf16> to vector<128x64xbf16>
    %cst = arith.constant dense<0.000000e+00> : vector<32x64xf32>
    %6 = tpu.matmul %3, %5, %cst {dimension_numbers = #tpu.dot_dimension_numbers<[1], [0], [0], [1], [0, 0, 1, 1], [], []>} : vector<32x128xbf16>, vector<128x64xbf16>, vector<32x64xf32> -> vector<32x64xf32>
    %cst_5 = arith.constant 0.000000e+00 : f32
    %7 = vector.broadcast %cst_5 : f32 to vector<32x64xf32>
    %8 = arith.cmpf oge, %6, %7 : vector<32x64xf32>
    %9 = vector.broadcast %0 : f32 to vector<32x64xf32>
    %10 = arith.mulf %9, %6 : vector<32x64xf32>
    %11 = arith.select %8, %6, %10 : vector<32x64xi1>, vector<32x64xf32>
    %12 = vector.extract_strided_slice %11 {offsets = [0, 0], sizes = [16, 64], strides = [1, 1]} : vector<32x64xf32> to vector<16x64xf32>
    %13 = vector.extract_strided_slice %11 {offsets = [16, 0], sizes = [16, 64], strides = [1, 1]} : vector<32x64xf32> to vector<16x64xf32>
    %14 = arith.maximumf %12, %13 : vector<16x64xf32>
    %15 = vector.extract_strided_slice %14 {offsets = [0, 0], sizes = [8, 64], strides = [1, 1]} : vector<16x64xf32> to vector<8x64xf32>
    %16 = vector.extract_strided_slice %14 {offsets = [8, 0], sizes = [8, 64], strides = [1, 1]} : vector<16x64xf32> to vector<8x64xf32>
    %17 = tpu.concatenate %15, %16 in 1 : vector<8x64xf32>, vector<8x64xf32> -> vector<8x128xf32>
    %18 = vector.extract_strided_slice %17 {offsets = [0, 0], sizes = [1, 128], strides = [1, 1]} : vector<8x128xf32> to vector<1x128xf32>
    %19 = vector.extract_strided_slice %17 {offsets = [1, 0], sizes = [1, 128], strides = [1, 1]} : vector<8x128xf32> to vector<1x128xf32>
    %20 = vector.extract_strided_slice %17 {offsets = [2, 0], sizes = [1, 128], strides = [1, 1]} : vector<8x128xf32> to vector<1x128xf32>
    %21 = vector.extract_strided_slice %17 {offsets = [3, 0], sizes = [1, 128], strides = [1, 1]} : vector<8x128xf32> to vector<1x128xf32>
    %22 = vector.extract_strided_slice %17 {offsets = [4, 0], sizes = [1, 128], strides = [1, 1]} : vector<8x128xf32> to vector<1x128xf32>
    %23 = vector.extract_strided_slice %17 {offsets = [5, 0], sizes = [1, 128], strides = [1, 1]} : vector<8x128xf32> to vector<1x128xf32>
    %24 = vector.extract_strided_slice %17 {offsets = [6, 0], sizes = [1, 128], strides = [1, 1]} : vector<8x128xf32> to vector<1x128xf32>
    %25 = vector.extract_strided_slice %17 {offsets = [7, 0], sizes = [1, 128], strides = [1, 1]} : vector<8x128xf32> to vector<1x128xf32>
    %26 = tpu.concatenate %18, %19, %20, %21, %22, %23, %24, %25 in 1 : vector<1x128xf32>, vector<1x128xf32>, vector<1x128xf32>, vector<1x128xf32>, vector<1x128xf32>, vector<1x128xf32>, vector<1x128xf32>, vector<1x128xf32> -> vector<1x1024xf32>
    %c1_6 = arith.constant 1 : index
    %c0_7 = arith.constant 0 : index
    %c0_8 = arith.constant 0 : index
    %27 = vector.load %arg2[%c1_6, %c0_7, %c0_8] : memref<2x128x64xbf16, #tpu.memory_space<vmem>>, vector<1x128x64xbf16>
    %28 = vector.shape_cast %27 : vector<1x128x64xbf16> to vector<128x64xbf16>
    %cst_9 = arith.constant dense<0.000000e+00> : vector<32x64xf32>
    %29 = tpu.matmul %3, %28, %cst_9 {dimension_numbers = #tpu.dot_dimension_numbers<[1], [0], [0], [1], [0, 0, 1, 1], [], []>} : vector<32x128xbf16>, vector<128x64xbf16>, vector<32x64xf32> -> vector<32x64xf32>
    %cst_10 = arith.constant 0.000000e+00 : f32
    %30 = vector.broadcast %cst_10 : f32 to vector<32x64xf32>
    %31 = arith.cmpf oge, %29, %30 : vector<32x64xf32>
    %32 = vector.broadcast %0 : f32 to vector<32x64xf32>
    %33 = arith.mulf %32, %29 : vector<32x64xf32>
    %34 = arith.select %31, %29, %33 : vector<32x64xi1>, vector<32x64xf32>
    %35 = vector.extract_strided_slice %34 {offsets = [0, 0], sizes = [16, 64], strides = [1, 1]} : vector<32x64xf32> to vector<16x64xf32>
    %36 = vector.extract_strided_slice %34 {offsets = [16, 0], sizes = [16, 64], strides = [1, 1]} : vector<32x64xf32> to vector<16x64xf32>
    %37 = arith.maximumf %35, %36 : vector<16x64xf32>
    %38 = vector.extract_strided_slice %37 {offsets = [0, 0], sizes = [8, 64], strides = [1, 1]} : vector<16x64xf32> to vector<8x64xf32>
    %39 = vector.extract_strided_slice %37 {offsets = [8, 0], sizes = [8, 64], strides = [1, 1]} : vector<16x64xf32> to vector<8x64xf32>
    %40 = tpu.concatenate %38, %39 in 1 : vector<8x64xf32>, vector<8x64xf32> -> vector<8x128xf32>
    %41 = vector.extract_strided_slice %40 {offsets = [0, 0], sizes = [1, 128], strides = [1, 1]} : vector<8x128xf32> to vector<1x128xf32>
    %42 = vector.extract_strided_slice %40 {offsets = [1, 0], sizes = [1, 128], strides = [1, 1]} : vector<8x128xf32> to vector<1x128xf32>
    %43 = vector.extract_strided_slice %40 {offsets = [2, 0], sizes = [1, 128], strides = [1, 1]} : vector<8x128xf32> to vector<1x128xf32>
    %44 = vector.extract_strided_slice %40 {offsets = [3, 0], sizes = [1, 128], strides = [1, 1]} : vector<8x128xf32> to vector<1x128xf32>
    %45 = vector.extract_strided_slice %40 {offsets = [4, 0], sizes = [1, 128], strides = [1, 1]} : vector<8x128xf32> to vector<1x128xf32>
    %46 = vector.extract_strided_slice %40 {offsets = [5, 0], sizes = [1, 128], strides = [1, 1]} : vector<8x128xf32> to vector<1x128xf32>
    %47 = vector.extract_strided_slice %40 {offsets = [6, 0], sizes = [1, 128], strides = [1, 1]} : vector<8x128xf32> to vector<1x128xf32>
    %48 = vector.extract_strided_slice %40 {offsets = [7, 0], sizes = [1, 128], strides = [1, 1]} : vector<8x128xf32> to vector<1x128xf32>
    %49 = tpu.concatenate %41, %42, %43, %44, %45, %46, %47, %48 in 1 : vector<1x128xf32>, vector<1x128xf32>, vector<1x128xf32>, vector<1x128xf32>, vector<1x128xf32>, vector<1x128xf32>, vector<1x128xf32>, vector<1x128xf32> -> vector<1x1024xf32>
    %50 = tpu.concatenate %26, %49 in 0 : vector<1x1024xf32>, vector<1x1024xf32> -> vector<2x1024xf32>
    %51 = arith.truncf %50 : vector<2x1024xf32> to vector<2x1024xbf16>
    %c0_11 = arith.constant 0 : index
    %c0_12 = arith.constant 0 : index
    %52 = vector.load %arg4[%c0_11, %c0_12] : memref<1024x512xbf16, #tpu.memory_space<vmem>>, vector<1024x512xbf16>
    %cst_13 = arith.constant dense<0.000000e+00> : vector<2x512xf32>
    %53 = tpu.matmul %51, %52, %cst_13 {dimension_numbers = #tpu.dot_dimension_numbers<[1], [0], [0], [1], [0, 0, 1, 1], [], []>} : vector<2x1024xbf16>, vector<1024x512xbf16>, vector<2x512xf32> -> vector<2x512xf32>
    %c0_14 = arith.constant 0 : index
    %c0_15 = arith.constant 0 : index
    %54 = vector.load %arg5[%c0_14, %c0_15] : memref<1x512xf32, #tpu.memory_space<vmem>>, vector<1x512xf32>
    %55 = vector.broadcast %54 : vector<1x512xf32> to vector<2x512xf32>
    %56 = arith.addf %53, %55 : vector<2x512xf32>
    %cst_16 = arith.constant 0.000000e+00 : f32
    %57 = vector.broadcast %cst_16 : f32 to vector<2x512xf32>
    %58 = arith.cmpf oge, %56, %57 : vector<2x512xf32>
    %59 = vector.broadcast %1 : f32 to vector<2x512xf32>
    %60 = arith.mulf %59, %56 : vector<2x512xf32>
    %61 = arith.select %58, %56, %60 : vector<2x512xi1>, vector<2x512xf32>
    %c0_17 = arith.constant 0 : index
    %c0_18 = arith.constant 0 : index
    %62 = vector.load %arg6[%c0_17, %c0_18] : memref<1x512xf32, #tpu.memory_space<vmem>>, vector<1x512xf32>
    %63 = vector.broadcast %62 : vector<1x512xf32> to vector<2x512xf32>
    %64 = arith.mulf %61, %63 : vector<2x512xf32>
    %cst_19 = arith.constant dense<0.000000e+00> : vector<2xf32>
    %65 = vector.multi_reduction <add>, %64, %cst_19 [1] : vector<2x512xf32> to vector<2xf32>
    %66 = vector.shape_cast %65 : vector<2xf32> to vector<2x1xf32>
    %67 = vector.broadcast %2 : f32 to vector<2x1xf32>
    %68 = arith.addf %66, %67 : vector<2x1xf32>
    %69 = vector.shape_cast %68 : vector<2x1xf32> to vector<2x1xf32>
    %70 = vector.broadcast %69 : vector<2x1xf32> to vector<2x128xf32>
    %c0_20 = arith.constant 0 : index
    %c0_21 = arith.constant 0 : index
    %71 = vector.load %arg7[%c0_20, %c0_21] : memref<2x128xf32, #tpu.memory_space<vmem>>, vector<2x128xf32>
    tpu.vector_store %arg7[%c0_20, %c0_21], %70 {strides = array<i32>} : memref<2x128xf32, #tpu.memory_space<vmem>>, vector<2x128xf32>,
    return
  }
  func.func @transform_0(%arg0: i32) -> i32 {
    %c0_i32 = arith.constant 0 : i32
    %c0_i32_0 = arith.constant 0 : i32
    return %c0_i32 : i32
  }
  func.func @transform_1(%arg0: i32) -> (i32, i32, i32) {
    %c0_i32 = arith.constant 0 : i32
    %c0_i32_0 = arith.constant 0 : i32
    %c0_i32_1 = arith.constant 0 : i32
    %c0_i32_2 = arith.constant 0 : i32
    return %c0_i32, %c0_i32_0, %c0_i32_1 : i32, i32, i32
  }
  func.func @transform_2(%arg0: i32) -> (i32, i32) {
    %c0_i32 = arith.constant 0 : i32
    %c0_i32_0 = arith.constant 0 : i32
    %c0_i32_1 = arith.constant 0 : i32
    return %c0_i32, %c0_i32_0 : i32, i32
  }
  func.func @transform_3(%arg0: i32) -> (i32, i32) {
    %c0_i32 = arith.constant 0 : i32
    %c0_i32_0 = arith.constant 0 : i32
    %c0_i32_1 = arith.constant 0 : i32
    return %c0_i32, %c0_i32_0 : i32, i32
  }
  func.func @transform_4(%arg0: i32) -> (i32, i32) {
    %c0_i32 = arith.constant 0 : i32
    %c0_i32_0 = arith.constant 0 : i32
    %c0_i32_1 = arith.constant 0 : i32
    return %c0_i32, %c0_i32_0 : i32, i32
  }
  func.func @transform_5(%arg0: i32) -> (i32, i32) {
    %c0_i32 = arith.constant 0 : i32
    %c0_i32_0 = arith.constant 0 : i32
    %c0_i32_1 = arith.constant 0 : i32
    return %c0_i32, %c0_i32_0 : i32, i32
  }
  func.func @transform_6(%arg0: i32) -> (i32, i32) {
    %c0_i32 = arith.constant 0 : i32
    %c0_i32_0 = arith.constant 0 : i32
    %c0_i32_1 = arith.constant 0 : i32
    return %c0_i32, %c0_i32_0 : i32, i32
  }
}

</mosaic_0001>

<llo_original>
// kernel: discriminator_forward.1
$region0: #{discriminator_forward.1}
  #allocation0 [shape = 'u32[]', space=smem, size = 0x4, offset = 0x4, fixed_abs, tag = 'smem constant byte address 0x4 - core index']
  #allocation1 [shape = 'u32[72,128]{1,0:T(1,128)}', space=vmem, size = 0x9000, scoped, tag = 'internal scratch']
  %s0 = inlined_call_operand.vmem [shape: f32[4], index: 0, kind: input, shape index: {}]
  %s1 = inlined_call_operand.vmem [shape: bf16[2,128,64], index: 1, kind: input, shape index: {}]
  %s2 = inlined_call_operand.vmem [shape: bf16[32,128], index: 2, kind: input, shape index: {}]
  %s3 = inlined_call_operand.vmem [shape: bf16[1024,512], index: 3, kind: input, shape index: {}]
  %s4 = inlined_call_operand.vmem [shape: f32[1,512], index: 4, kind: input, shape index: {}]
  %s5 = inlined_call_operand.vmem [shape: f32[1,512], index: 5, kind: input, shape index: {}]
  %s6 = inlined_call_operand.vmem [shape: f32[2,128], index: 6, kind: output, shape index: {}]
  %s7 = sld [smem:[#allocation0]]
  $region38: #{discriminator_forward.1} parent=0
    _
  %s9 = ssub.s32 1, %s7
  %s10 = scalar_select 0, %s9, %s7
  $region1: #{discriminator_forward.1} parent=0
    #allocation2 [shape = 'u8[512]{0}', space=smem, size = 0x200, scoped, tag = 'input window, operand 0, single buffered']
    #allocation3 [shape = 's32[1]{0}', space=sflag, size = 0x4, scoped, tag = 'scoped memory for discriminator_forward.1']
    %11 = vsyncpa [#allocation3], 0
    // Predicated region
    $region2: #{discriminator_forward.1} parent=1 // pred_check
      _
    $region3: #{discriminator_forward.1} parent=1 // pred_check_branch
      %13 = sbr.rel (0) target = $region5
    $region4: #{discriminator_forward.1} parent=1 // pred_region
      %15 = vsyncadd [#allocation3], 0
      %s17 = sshll.u32 %s0, 4
      %s18 = int_to_ptr.vmem [resolvable:$true] %s17
      %20 = dma.vmem_to_smem %s18, 16, [#allocation2], [#allocation3]
    $region5: #{discriminator_forward.1} parent=1 // pred_fallthru
      _
    // Predicated region
    $region6: #{discriminator_forward.1} parent=1 // pred_check
      _
    $region7: #{discriminator_forward.1} parent=1 // pred_check_branch
      %22 = sbr.rel (0) target = $region9
    $region8: #{discriminator_forward.1} parent=1 // pred_region
      _
    $region9: #{discriminator_forward.1} parent=1 // pred_fallthru
      _
    // Predicated region
    $region10: #{discriminator_forward.1} parent=1 // pred_check
      _
    $region11: #{discriminator_forward.1} parent=1 // pred_check_branch
      %24 = sbr.rel (0) target = $region13
    $region12: #{discriminator_forward.1} parent=1 // pred_region
      _
    $region13: #{discriminator_forward.1} parent=1 // pred_fallthru
      _
    // Predicated region
    $region14: #{discriminator_forward.1} parent=1 // pred_check
      _
    $region15: #{discriminator_forward.1} parent=1 // pred_check_branch
      %26 = sbr.rel (0) target = $region17
    $region16: #{discriminator_forward.1} parent=1 // pred_region
      _
    $region17: #{discriminator_forward.1} parent=1 // pred_fallthru
      _
    // Predicated region
    $region18: #{discriminator_forward.1} parent=1 // pred_check
      _
    $region19: #{discriminator_forward.1} parent=1 // pred_check_branch
      %28 = sbr.rel (0) target = $region21
    $region20: #{discriminator_forward.1} parent=1 // pred_region
      _
    $region21: #{discriminator_forward.1} parent=1 // pred_fallthru
      _
    // Predicated region
    $region22: #{discriminator_forward.1} parent=1 // pred_check
      _
    $region23: #{discriminator_forward.1} parent=1 // pred_check_branch
      %30 = sbr.rel (0) target = $region25
    $region24: #{discriminator_forward.1} parent=1 // pred_region
      _
    $region25: #{discriminator_forward.1} parent=1 // pred_fallthru
      _
    // Predicated region
    $region26: #{discriminator_forward.1} parent=1 // pred_check
      _
    $region27: #{discriminator_forward.1} parent=1 // pred_check_branch
      %32 = sbr.rel (0) target = $region29
    $region28: #{discriminator_forward.1} parent=1 // pred_region
      %34 = dma.done [#allocation3], 16
    $region29: #{discriminator_forward.1} parent=1 // pred_fallthru
      _
    %35 = sfence
    %s36 = sld [smem:[#allocation2]]
    %s37 = sld [smem:[#allocation2 + $0x1]]
    %s38 = sld [smem:[#allocation2 + $0x2]]
    %v39 = vld [vmem:[%s2] sm:$0xf]
    %v40 = vld [vmem:[%s2 + $0x4] sm:$0xf]
    %v41 = vld [vmem:[%s2 + $0x8] sm:$0xf]
    %v42 = vld [vmem:[%s2 + $0xc] sm:$0xf]
    %v43 = vld [vmem:[%s1] sm:$0xf]
    %v44 = vld [vmem:[%s1 + $0x4] sm:$0xf]
    %v45 = vld [vmem:[%s1 + $0x8] sm:$0xf]
    %v46 = vld [vmem:[%s1 + $0xc] sm:$0xf]
    %v47 = vld [vmem:[%s1 + $0x10] sm:$0xf]
    %v48 = vld [vmem:[%s1 + $0x14] sm:$0xf]
    %v49 = vld [vmem:[%s1 + $0x18] sm:$0xf]
    %v50 = vld [vmem:[%s1 + $0x1c] sm:$0xf]
    %v51 = vld [vmem:[%s1 + $0x20] sm:$0xf]
    %v52 = vld [vmem:[%s1 + $0x24] sm:$0xf]
    %v53 = vld [vmem:[%s1 + $0x28] sm:$0xf]
    %v54 = vld [vmem:[%s1 + $0x2c] sm:$0xf]
    %v55 = vld [vmem:[%s1 + $0x30] sm:$0xf]
    %v56 = vld [vmem:[%s1 + $0x34] sm:$0xf]
    %v57 = vld [vmem:[%s1 + $0x38] sm:$0xf]
    %v58 = vld [vmem:[%s1 + $0x3c] sm:$0xf]
    %v63 = vunpack.c.l.b16 %v39
    %v64 = vunpack.c.l.b16 %v40
    %v65 = vunpack.c.l.b16 %v41
    %v66 = vunpack.c.l.b16 %v42
    %v67 = vpack.c.b16 %v64, %v63
    %v68 = vpack.c.b16 %v66, %v65
    %v87 = vunpack.c.l.b16 %v43
    %v88 = vunpack.c.l.b16 %v44
    %v89 = vunpack.c.l.b16 %v45
    %v90 = vunpack.c.l.b16 %v46
    %v91 = vunpack.c.l.b16 %v47
    %v92 = vunpack.c.l.b16 %v48
    %v93 = vunpack.c.l.b16 %v49
    %v94 = vunpack.c.l.b16 %v50
    %v95 = vunpack.c.l.b16 %v51
    %v96 = vunpack.c.l.b16 %v52
    %v97 = vunpack.c.l.b16 %v53
    %v98 = vunpack.c.l.b16 %v54
    %v99 = vunpack.c.l.b16 %v55
    %v100 = vunpack.c.l.b16 %v56
    %v101 = vunpack.c.l.b16 %v57
    %v102 = vunpack.c.l.b16 %v58
    %v103 = vpack.c.b16 %v88, %v87
    %v104 = vpack.c.b16 %v90, %v89
    %v105 = vpack.c.b16 %v92, %v91
    %v106 = vpack.c.b16 %v94, %v93
    %v107 = vpack.c.b16 %v96, %v95
    %v108 = vpack.c.b16 %v98, %v97
    %v109 = vpack.c.b16 %v100, %v99
    %v110 = vpack.c.b16 %v102, %v101
    %119 = vmatpush.bf16.msra.mxu0 %v110
    %120 = vmatpush.bf16.msra.mxu0 %v109
    %121 = vmatpush.bf16.msra.mxu0 %v108
    %122 = vmatpush.bf16.msra.mxu0 %v107
    %123 = vmatpush.bf16.msra.mxu0 %v106
    %124 = vmatpush.bf16.msra.mxu0 %v105
    %125 = vmatpush.bf16.msra.mxu0 %v104
    %126 = vmatpush.bf16.msra.mxu0 %v103
    %127 = vmatmul.bf16.gmra.mxu0 %v67
    %v128 = vpop.f32.mrf.mxu0
    %v129 = vadd.f32 0.0, %v128
    %v130 = vpop.f32.mrf.mxu0
    %v131 = vadd.f32 0.0, %v130
    %132 = vmatmul.bf16.gmra.mxu0 %v68
    %v133 = vpop.f32.mrf.mxu0
    %v134 = vadd.f32 0.0, %v133
    %v135 = vpop.f32.mrf.mxu0
    %v136 = vadd.f32 0.0, %v135
    %137 = vdwg.mxu0
    %vm138 = vcmp.ge.f32.partialorder %v129, 0.0
    %vm139 = vcmp.ge.f32.partialorder %v131, 0.0
    %vm140 = vcmp.ge.f32.partialorder %v134, 0.0
    %vm141 = vcmp.ge.f32.partialorder %v136, 0.0
    %v142 = vstv %s36
    %v143 = vmul.f32 %v142, %v129
    %v144 = vmul.f32 %v142, %v131
    %v145 = vmul.f32 %v142, %v134
    %v146 = vmul.f32 %v142, %v136
    %v147 = vsel %vm138, %v129, %v143
    %v148 = vsel %vm139, %v131, %v144
    %v149 = vsel %vm140, %v134, %v145
    %v150 = vsel %vm141, %v136, %v146
    %v151 = vmax.f32 %v147, %v149
    %v152 = vmax.f32 %v148, %v150
    %154 = vrot.lane.b32.xlu0 %v152, 64
    %v155 = vpop.permute.xlu0 %154
    %vm157 = vcmask 523264
    %v158 = vsel %vm157, %v151, %v155
    %v160 = vrot.slane %v158, 1
    %v162 = vrot.slane %v158, 2
    %v164 = vrot.slane %v158, 3
    %v166 = vrot.slane %v158, 4
    %v168 = vrot.slane %v158, 5
    %v170 = vrot.slane %v158, 6
    %v172 = vrot.slane %v158, 7
    %s174 = scalar_lea.vmem %s1, 64
    %v175 = vld [vmem:[%s174] sm:$0xf]
    %v176 = vld [vmem:[%s174 + $0x4] sm:$0xf]
    %v177 = vld [vmem:[%s174 + $0x8] sm:$0xf]
    %v178 = vld [vmem:[%s174 + $0xc] sm:$0xf]
    %v179 = vld [vmem:[%s174 + $0x10] sm:$0xf]
    %v180 = vld [vmem:[%s174 + $0x14] sm:$0xf]
    %v181 = vld [vmem:[%s174 + $0x18] sm:$0xf]
    %v182 = vld [vmem:[%s174 + $0x1c] sm:$0xf]
    %v183 = vld [vmem:[%s174 + $0x20] sm:$0xf]
    %v184 = vld [vmem:[%s174 + $0x24] sm:$0xf]
    %v185 = vld [vmem:[%s174 + $0x28] sm:$0xf]
    %v186 = vld [vmem:[%s174 + $0x2c] sm:$0xf]
    %v187 = vld [vmem:[%s174 + $0x30] sm:$0xf]
    %v188 = vld [vmem:[%s174 + $0x34] sm:$0xf]
    %v189 = vld [vmem:[%s174 + $0x38] sm:$0xf]
    %v190 = vld [vmem:[%s174 + $0x3c] sm:$0xf]
    %v207 = vunpack.c.l.b16 %v175
    %v208 = vunpack.c.l.b16 %v176
    %v209 = vunpack.c.l.b16 %v177
    %v210 = vunpack.c.l.b16 %v178
    %v211 = vunpack.c.l.b16 %v179
    %v212 = vunpack.c.l.b16 %v180
    %v213 = vunpack.c.l.b16 %v181
    %v214 = vunpack.c.l.b16 %v182
    %v215 = vunpack.c.l.b16 %v183
    %v216 = vunpack.c.l.b16 %v184
    %v217 = vunpack.c.l.b16 %v185
    %v218 = vunpack.c.l.b16 %v186
    %v219 = vunpack.c.l.b16 %v187
    %v220 = vunpack.c.l.b16 %v188
    %v221 = vunpack.c.l.b16 %v189
    %v222 = vunpack.c.l.b16 %v190
    %v223 = vpack.c.b16 %v208, %v207
    %v224 = vpack.c.b16 %v210, %v209
    %v225 = vpack.c.b16 %v212, %v211
    %v226 = vpack.c.b16 %v214, %v213
    %v227 = vpack.c.b16 %v216, %v215
    %v228 = vpack.c.b16 %v218, %v217
    %v229 = vpack.c.b16 %v220, %v219
    %v230 = vpack.c.b16 %v222, %v221
    %239 = vmatpush.bf16.msra.mxu0 %v230
    %240 = vmatpush.bf16.msra.mxu0 %v229
    %241 = vmatpush.bf16.msra.mxu0 %v228
    %242 = vmatpush.bf16.msra.mxu0 %v227
    %243 = vmatpush.bf16.msra.mxu0 %v226
    %244 = vmatpush.bf16.msra.mxu0 %v225
    %245 = vmatpush.bf16.msra.mxu0 %v224
    %246 = vmatpush.bf16.msra.mxu0 %v223
    %247 = vmatmul.bf16.gmra.mxu0 %v67
    %v248 = vpop.f32.mrf.mxu0
    %v249 = vadd.f32 0.0, %v248
    %v250 = vpop.f32.mrf.mxu0
    %v251 = vadd.f32 0.0, %v250
    %252 = vmatmul.bf16.gmra.mxu0 %v68
    %v253 = vpop.f32.mrf.mxu0
    %v254 = vadd.f32 0.0, %v253
    %v255 = vpop.f32.mrf.mxu0
    %v256 = vadd.f32 0.0, %v255
    %257 = vdwg.mxu0
    %vm258 = vcmp.ge.f32.partialorder %v249, 0.0
    %vm259 = vcmp.ge.f32.partialorder %v251, 0.0
    %vm260 = vcmp.ge.f32.partialorder %v254, 0.0
    %vm261 = vcmp.ge.f32.partialorder %v256, 0.0
    %v262 = vmul.f32 %v142, %v249
    %v263 = vmul.f32 %v142, %v251
    %v264 = vmul.f32 %v142, %v254
    %v265 = vmul.f32 %v142, %v256
    %v266 = vsel %vm258, %v249, %v262
    %v267 = vsel %vm259, %v251, %v263
    %v268 = vsel %vm260, %v254, %v264
    %v269 = vsel %vm261, %v256, %v265
    %v270 = vmax.f32 %v266, %v268
    %v271 = vmax.f32 %v267, %v269
    %273 = vrot.lane.b32.xlu0 %v271, 64
    %v274 = vpop.permute.xlu0 %273
    %v276 = vsel %vm157, %v270, %v274
    %v278 = vrot.slane %v276, 1
    %v279 = vrot.slane %v276, 2
    %v280 = vrot.slane %v276, 3
    %v281 = vrot.slane %v276, 4
    %v282 = vrot.slane %v276, 5
    %v283 = vrot.slane %v276, 6
    %v284 = vrot.slane %v276, 7
    %v285 = vrot.slane %v278, 7
    %v286 = vrot.slane %v279, 7
    %v287 = vrot.slane %v280, 7
    %v288 = vrot.slane %v281, 7
    %v289 = vrot.slane %v282, 7
    %v290 = vrot.slane %v283, 7
    %v291 = vrot.slane %v284, 7
    %vm300 = vcmask 1040384
    %v301 = vsel %vm300, %v158, %v284
    %v302 = vsel %vm300, %v160, %v285
    %v303 = vsel %vm300, %v162, %v286
    %v304 = vsel %vm300, %v164, %v287
    %v305 = vsel %vm300, %v166, %v288
    %v306 = vsel %vm300, %v168, %v289
    %v307 = vsel %vm300, %v170, %v290
    %v308 = vsel %vm300, %v172, %v291
    %v309 = vpack.c.bf16 %v301, %v301
    %v310 = vpack.c.bf16 %v302, %v302
    %v311 = vpack.c.bf16 %v303, %v303
    %v312 = vpack.c.bf16 %v304, %v304
    %v313 = vpack.c.bf16 %v305, %v305
    %v314 = vpack.c.bf16 %v306, %v306
    %v315 = vpack.c.bf16 %v307, %v307
    %v316 = vpack.c.bf16 %v308, %v308
    %v317 = vld [vmem:[%s3] sm:$0xff]
    %v318 = vld [vmem:[%s3 + $0x8] sm:$0xff]
    %v319 = vld [vmem:[%s3 + $0x10] sm:$0xff]
    %v320 = vld [vmem:[%s3 + $0x18] sm:$0xff]
    %v321 = vld [vmem:[%s3 + $0x20] sm:$0xff]
    %v322 = vld [vmem:[%s3 + $0x28] sm:$0xff]
    %v323 = vld [vmem:[%s3 + $0x30] sm:$0xff]
    %v324 = vld [vmem:[%s3 + $0x38] sm:$0xff]
    %v325 = vld [vmem:[%s3 + $0x40] sm:$0xff]
    %v326 = vld [vmem:[%s3 + $0x48] sm:$0xff]
    %v327 = vld [vmem:[%s3 + $0x50] sm:$0xff]
    %v328 = vld [vmem:[%s3 + $0x58] sm:$0xff]
    %v329 = vld [vmem:[%s3 + $0x60] sm:$0xff]
    %v330 = vld [vmem:[%s3 + $0x68] sm:$0xff]
    %v331 = vld [vmem:[%s3 + $0x70] sm:$0xff]
    %v332 = vld [vmem:[%s3 + $0x78] sm:$0xff]
    %v333 = vld [vmem:[%s3 + $0x80] sm:$0xff]
    %v334 = vld [vmem:[%s3 + $0x88] sm:$0xff]
    %v335 = vld [vmem:[%s3 + $0x90] sm:$0xff]
    %v336 = vld [vmem:[%s3 + $0x98] sm:$0xff]
    %v337 = vld [vmem:[%s3 + $0xa0] sm:$0xff]
    %v338 = vld [vmem:[%s3 + $0xa8] sm:$0xff]
    %v339 = vld [vmem:[%s3 + $0xb0] sm:$0xff]
    %v340 = vld [vmem:[%s3 + $0xb8] sm:$0xff]
    %v341 = vld [vmem:[%s3 + $0xc0] sm:$0xff]
    %v342 = vld [vmem:[%s3 + $0xc8] sm:$0xff]
    %v343 = vld [vmem:[%s3 + $0xd0] sm:$0xff]
    %v344 = vld [vmem:[%s3 + $0xd8] sm:$0xff]
    %v345 = vld [vmem:[%s3 + $0xe0] sm:$0xff]
    %v346 = vld [vmem:[%s3 + $0xe8] sm:$0xff]
    %v347 = vld [vmem:[%s3 + $0xf0] sm:$0xff]
    %v348 = vld [vmem:[%s3 + $0xf8] sm:$0xff]
    %v349 = vld [vmem:[%s3 + $0x100] sm:$0xff]
    %v350 = vld [vmem:[%s3 + $0x108] sm:$0xff]
    %v351 = vld [vmem:[%s3 + $0x110] sm:$0xff]
    %v352 = vld [vmem:[%s3 + $0x118] sm:$0xff]
    %v353 = vld [vmem:[%s3 + $0x120] sm:$0xff]
    %v354 = vld [vmem:[%s3 + $0x128] sm:$0xff]
    %v355 = vld [vmem:[%s3 + $0x130] sm:$0xff]
    %v356 = vld [vmem:[%s3 + $0x138] sm:$0xff]
    %v357 = vld [vmem:[%s3 + $0x140] sm:$0xff]
    %v358 = vld [vmem:[%s3 + $0x148] sm:$0xff]
    %v359 = vld [vmem:[%s3 + $0x150] sm:$0xff]
    %v360 = vld [vmem:[%s3 + $0x158] sm:$0xff]
    %v361 = vld [vmem:[%s3 + $0x160] sm:$0xff]
    %v362 = vld [vmem:[%s3 + $0x168] sm:$0xff]
    %v363 = vld [vmem:[%s3 + $0x170] sm:$0xff]
    %v364 = vld [vmem:[%s3 + $0x178] sm:$0xff]
    %v365 = vld [vmem:[%s3 + $0x180] sm:$0xff]
    %v366 = vld [vmem:[%s3 + $0x188] sm:$0xff]
    %v367 = vld [vmem:[%s3 + $0x190] sm:$0xff]
    %v368 = vld [vmem:[%s3 + $0x198] sm:$0xff]
    %v369 = vld [vmem:[%s3 + $0x1a0] sm:$0xff]
    %v370 = vld [vmem:[%s3 + $0x1a8] sm:$0xff]
    %v371 = vld [vmem:[%s3 + $0x1b0] sm:$0xff]
    %v372 = vld [vmem:[%s3 + $0x1b8] sm:$0xff]
    %v373 = vld [vmem:[%s3 + $0x1c0] sm:$0xff]
    %v374 = vld [vmem:[%s3 + $0x1c8] sm:$0xff]
    %v375 = vld [vmem:[%s3 + $0x1d0] sm:$0xff]
    %v376 = vld [vmem:[%s3 + $0x1d8] sm:$0xff]
    %v377 = vld [vmem:[%s3 + $0x1e0] sm:$0xff]
    %v378 = vld [vmem:[%s3 + $0x1e8] sm:$0xff]
    %v379 = vld [vmem:[%s3 + $0x1f0] sm:$0xff]
    %v380 = vld [vmem:[%s3 + $0x1f8] sm:$0xff]
    %v381 = vld [vmem:[%s3 + $0x200] sm:$0xff]
    %v382 = vld [vmem:[%s3 + $0x208] sm:$0xff]
    %v383 = vld [vmem:[%s3 + $0x210] sm:$0xff]
    %v384 = vld [vmem:[%s3 + $0x218] sm:$0xff]
    %v385 = vld [vmem:[%s3 + $0x220] sm:$0xff]
    %v386 = vld [vmem:[%s3 + $0x228] sm:$0xff]
    %v387 = vld [vmem:[%s3 + $0x230] sm:$0xff]
    %v388 = vld [vmem:[%s3 + $0x238] sm:$0xff]
    %v389 = vld [vmem:[%s3 + $0x240] sm:$0xff]
    %v390 = vld [vmem:[%s3 + $0x248] sm:$0xff]
    %v391 = vld [vmem:[%s3 + $0x250] sm:$0xff]
    %v392 = vld [vmem:[%s3 + $0x258] sm:$0xff]
    %v393 = vld [vmem:[%s3 + $0x260] sm:$0xff]
    %v394 = vld [vmem:[%s3 + $0x268] sm:$0xff]
    %v395 = vld [vmem:[%s3 + $0x270] sm:$0xff]
    %v396 = vld [vmem:[%s3 + $0x278] sm:$0xff]
    %v397 = vld [vmem:[%s3 + $0x280] sm:$0xff]
    %v398 = vld [vmem:[%s3 + $0x288] sm:$0xff]
    %v399 = vld [vmem:[%s3 + $0x290] sm:$0xff]
    %v400 = vld [vmem:[%s3 + $0x298] sm:$0xff]
    %v401 = vld [vmem:[%s3 + $0x2a0] sm:$0xff]
    %v402 = vld [vmem:[%s3 + $0x2a8] sm:$0xff]
    %v403 = vld [vmem:[%s3 + $0x2b0] sm:$0xff]
    %v404 = vld [vmem:[%s3 + $0x2b8] sm:$0xff]
    %v405 = vld [vmem:[%s3 + $0x2c0] sm:$0xff]
    %v406 = vld [vmem:[%s3 + $0x2c8] sm:$0xff]
    %v407 = vld [vmem:[%s3 + $0x2d0] sm:$0xff]
    %v408 = vld [vmem:[%s3 + $0x2d8] sm:$0xff]
    %v409 = vld [vmem:[%s3 + $0x2e0] sm:$0xff]
    %v410 = vld [vmem:[%s3 + $0x2e8] sm:$0xff]
    %v411 = vld [vmem:[%s3 + $0x2f0] sm:$0xff]
    %v412 = vld [vmem:[%s3 + $0x2f8] sm:$0xff]
    %v413 = vld [vmem:[%s3 + $0x300] sm:$0xff]
    %v414 = vld [vmem:[%s3 + $0x308] sm:$0xff]
    %v415 = vld [vmem:[%s3 + $0x310] sm:$0xff]
    %v416 = vld [vmem:[%s3 + $0x318] sm:$0xff]
    %v417 = vld [vmem:[%s3 + $0x320] sm:$0xff]
    %v418 = vld [vmem:[%s3 + $0x328] sm:$0xff]
    %v419 = vld [vmem:[%s3 + $0x330] sm:$0xff]
    %v420 = vld [vmem:[%s3 + $0x338] sm:$0xff]
    %v421 = vld [vmem:[%s3 + $0x340] sm:$0xff]
    %v422 = vld [vmem:[%s3 + $0x348] sm:$0xff]
    %v423 = vld [vmem:[%s3 + $0x350] sm:$0xff]
    %v424 = vld [vmem:[%s3 + $0x358] sm:$0xff]
    %v425 = vld [vmem:[%s3 + $0x360] sm:$0xff]
    %v426 = vld [vmem:[%s3 + $0x368] sm:$0xff]
    %v427 = vld [vmem:[%s3 + $0x370] sm:$0xff]
    %v428 = vld [vmem:[%s3 + $0x378] sm:$0xff]
    %v429 = vld [vmem:[%s3 + $0x380] sm:$0xff]
    %v430 = vld [vmem:[%s3 + $0x388] sm:$0xff]
    %v431 = vld [vmem:[%s3 + $0x390] sm:$0xff]
    %v432 = vld [vmem:[%s3 + $0x398] sm:$0xff]
    %v433 = vld [vmem:[%s3 + $0x3a0] sm:$0xff]
    %v434 = vld [vmem:[%s3 + $0x3a8] sm:$0xff]
    %v435 = vld [vmem:[%s3 + $0x3b0] sm:$0xff]
    %v436 = vld [vmem:[%s3 + $0x3b8] sm:$0xff]
    %v437 = vld [vmem:[%s3 + $0x3c0] sm:$0xff]
    %v438 = vld [vmem:[%s3 + $0x3c8] sm:$0xff]
    %v439 = vld [vmem:[%s3 + $0x3d0] sm:$0xff]
    %v440 = vld [vmem:[%s3 + $0x3d8] sm:$0xff]
    %v441 = vld [vmem:[%s3 + $0x3e0] sm:$0xff]
    %v442 = vld [vmem:[%s3 + $0x3e8] sm:$0xff]
    %v443 = vld [vmem:[%s3 + $0x3f0] sm:$0xff]
    %v444 = vld [vmem:[%s3 + $0x3f8] sm:$0xff]
    %v445 = vld [vmem:[%s3 + $0x400] sm:$0xff]
    %v446 = vld [vmem:[%s3 + $0x408] sm:$0xff]
    %v447 = vld [vmem:[%s3 + $0x410] sm:$0xff]
    %v448 = vld [vmem:[%s3 + $0x418] sm:$0xff]
    %v449 = vld [vmem:[%s3 + $0x420] sm:$0xff]
    %v450 = vld [vmem:[%s3 + $0x428] sm:$0xff]
    %v451 = vld [vmem:[%s3 + $0x430] sm:$0xff]
    %v452 = vld [vmem:[%s3 + $0x438] sm:$0xff]
    %v453 = vld [vmem:[%s3 + $0x440] sm:$0xff]
    %v454 = vld [vmem:[%s3 + $0x448] sm:$0xff]
    %v455 = vld [vmem:[%s3 + $0x450] sm:$0xff]
    %v456 = vld [vmem:[%s3 + $0x458] sm:$0xff]
    %v457 = vld [vmem:[%s3 + $0x460] sm:$0xff]
    %v458 = vld [vmem:[%s3 + $0x468] sm:$0xff]
    %v459 = vld [vmem:[%s3 + $0x470] sm:$0xff]
    %v460 = vld [vmem:[%s3 + $0x478] sm:$0xff]
    %v461 = vld [vmem:[%s3 + $0x480] sm:$0xff]
    %v462 = vld [vmem:[%s3 + $0x488] sm:$0xff]
    %v463 = vld [vmem:[%s3 + $0x490] sm:$0xff]
    %v464 = vld [vmem:[%s3 + $0x498] sm:$0xff]
    %v465 = vld [vmem:[%s3 + $0x4a0] sm:$0xff]
    %v466 = vld [vmem:[%s3 + $0x4a8] sm:$0xff]
    %v467 = vld [vmem:[%s3 + $0x4b0] sm:$0xff]
    %v468 = vld [vmem:[%s3 + $0x4b8] sm:$0xff]
    %v469 = vld [vmem:[%s3 + $0x4c0] sm:$0xff]
    %v470 = vld [vmem:[%s3 + $0x4c8] sm:$0xff]
    %v471 = vld [vmem:[%s3 + $0x4d0] sm:$0xff]
    %v472 = vld [vmem:[%s3 + $0x4d8] sm:$0xff]
    %v473 = vld [vmem:[%s3 + $0x4e0] sm:$0xff]
    %v474 = vld [vmem:[%s3 + $0x4e8] sm:$0xff]
    %v475 = vld [vmem:[%s3 + $0x4f0] sm:$0xff]
    %v476 = vld [vmem:[%s3 + $0x4f8] sm:$0xff]
    %v477 = vld [vmem:[%s3 + $0x500] sm:$0xff]
    %v478 = vld [vmem:[%s3 + $0x508] sm:$0xff]
    %v479 = vld [vmem:[%s3 + $0x510] sm:$0xff]
    %v480 = vld [vmem:[%s3 + $0x518] sm:$0xff]
    %v481 = vld [vmem:[%s3 + $0x520] sm:$0xff]
    %v482 = vld [vmem:[%s3 + $0x528] sm:$0xff]
    %v483 = vld [vmem:[%s3 + $0x530] sm:$0xff]
    %v484 = vld [vmem:[%s3 + $0x538] sm:$0xff]
    %v485 = vld [vmem:[%s3 + $0x540] sm:$0xff]
    %v486 = vld [vmem:[%s3 + $0x548] sm:$0xff]
    %v487 = vld [vmem:[%s3 + $0x550] sm:$0xff]
    %v488 = vld [vmem:[%s3 + $0x558] sm:$0xff]
    %v489 = vld [vmem:[%s3 + $0x560] sm:$0xff]
    %v490 = vld [vmem:[%s3 + $0x568] sm:$0xff]
    %v491 = vld [vmem:[%s3 + $0x570] sm:$0xff]
    %v492 = vld [vmem:[%s3 + $0x578] sm:$0xff]
    %v493 = vld [vmem:[%s3 + $0x580] sm:$0xff]
    %v494 = vld [vmem:[%s3 + $0x588] sm:$0xff]
    %v495 = vld [vmem:[%s3 + $0x590] sm:$0xff]
    %v496 = vld [vmem:[%s3 + $0x598] sm:$0xff]
    %v497 = vld [vmem:[%s3 + $0x5a0] sm:$0xff]
    %v498 = vld [vmem:[%s3 + $0x5a8] sm:$0xff]
    %v499 = vld [vmem:[%s3 + $0x5b0] sm:$0xff]
    %v500 = vld [vmem:[%s3 + $0x5b8] sm:$0xff]
    %v501 = vld [vmem:[%s3 + $0x5c0] sm:$0xff]
    %v502 = vld [vmem:[%s3 + $0x5c8] sm:$0xff]
    %v503 = vld [vmem:[%s3 + $0x5d0] sm:$0xff]
    %v504 = vld [vmem:[%s3 + $0x5d8] sm:$0xff]
    %v505 = vld [vmem:[%s3 + $0x5e0] sm:$0xff]
    %v506 = vld [vmem:[%s3 + $0x5e8] sm:$0xff]
    %v507 = vld [vmem:[%s3 + $0x5f0] sm:$0xff]
    %v508 = vld [vmem:[%s3 + $0x5f8] sm:$0xff]
    %v509 = vld [vmem:[%s3 + $0x600] sm:$0xff]
    %v510 = vld [vmem:[%s3 + $0x608] sm:$0xff]
    %v511 = vld [vmem:[%s3 + $0x610] sm:$0xff]
    %v512 = vld [vmem:[%s3 + $0x618] sm:$0xff]
    %v513 = vld [vmem:[%s3 + $0x620] sm:$0xff]
    %v514 = vld [vmem:[%s3 + $0x628] sm:$0xff]
    %v515 = vld [vmem:[%s3 + $0x630] sm:$0xff]
    %v516 = vld [vmem:[%s3 + $0x638] sm:$0xff]
    %v517 = vld [vmem:[%s3 + $0x640] sm:$0xff]
    %v518 = vld [vmem:[%s3 + $0x648] sm:$0xff]
    %v519 = vld [vmem:[%s3 + $0x650] sm:$0xff]
    %v520 = vld [vmem:[%s3 + $0x658] sm:$0xff]
    %v521 = vld [vmem:[%s3 + $0x660] sm:$0xff]
    %v522 = vld [vmem:[%s3 + $0x668] sm:$0xff]
    %v523 = vld [vmem:[%s3 + $0x670] sm:$0xff]
    %v524 = vld [vmem:[%s3 + $0x678] sm:$0xff]
    %v525 = vld [vmem:[%s3 + $0x680] sm:$0xff]
    %v526 = vld [vmem:[%s3 + $0x688] sm:$0xff]
    %v527 = vld [vmem:[%s3 + $0x690] sm:$0xff]
    %v528 = vld [vmem:[%s3 + $0x698] sm:$0xff]
    %v529 = vld [vmem:[%s3 + $0x6a0] sm:$0xff]
    %v530 = vld [vmem:[%s3 + $0x6a8] sm:$0xff]
    %v531 = vld [vmem:[%s3 + $0x6b0] sm:$0xff]
    %v532 = vld [vmem:[%s3 + $0x6b8] sm:$0xff]
    %v533 = vld [vmem:[%s3 + $0x6c0] sm:$0xff]
    %v534 = vld [vmem:[%s3 + $0x6c8] sm:$0xff]
    %v535 = vld [vmem:[%s3 + $0x6d0] sm:$0xff]
    %v536 = vld [vmem:[%s3 + $0x6d8] sm:$0xff]
    %v537 = vld [vmem:[%s3 + $0x6e0] sm:$0xff]
    %v538 = vld [vmem:[%s3 + $0x6e8] sm:$0xff]
    %v539 = vld [vmem:[%s3 + $0x6f0] sm:$0xff]
    %v540 = vld [vmem:[%s3 + $0x6f8] sm:$0xff]
    %v541 = vld [vmem:[%s3 + $0x700] sm:$0xff]
    %v542 = vld [vmem:[%s3 + $0x708] sm:$0xff]
    %v543 = vld [vmem:[%s3 + $0x710] sm:$0xff]
    %v544 = vld [vmem:[%s3 + $0x718] sm:$0xff]
    %v545 = vld [vmem:[%s3 + $0x720] sm:$0xff]
    %v546 = vld [vmem:[%s3 + $0x728] sm:$0xff]
    %v547 = vld [vmem:[%s3 + $0x730] sm:$0xff]
    %v548 = vld [vmem:[%s3 + $0x738] sm:$0xff]
    %v549 = vld [vmem:[%s3 + $0x740] sm:$0xff]
    %v550 = vld [vmem:[%s3 + $0x748] sm:$0xff]
    %v551 = vld [vmem:[%s3 + $0x750] sm:$0xff]
    %v552 = vld [vmem:[%s3 + $0x758] sm:$0xff]
    %v553 = vld [vmem:[%s3 + $0x760] sm:$0xff]
    %v554 = vld [vmem:[%s3 + $0x768] sm:$0xff]
    %v555 = vld [vmem:[%s3 + $0x770] sm:$0xff]
    %v556 = vld [vmem:[%s3 + $0x778] sm:$0xff]
    %v557 = vld [vmem:[%s3 + $0x780] sm:$0xff]
    %v558 = vld [vmem:[%s3 + $0x788] sm:$0xff]
    %v559 = vld [vmem:[%s3 + $0x790] sm:$0xff]
    %v560 = vld [vmem:[%s3 + $0x798] sm:$0xff]
    %v561 = vld [vmem:[%s3 + $0x7a0] sm:$0xff]
    %v562 = vld [vmem:[%s3 + $0x7a8] sm:$0xff]
    %v563 = vld [vmem:[%s3 + $0x7b0] sm:$0xff]
    %v564 = vld [vmem:[%s3 + $0x7b8] sm:$0xff]
    %v565 = vld [vmem:[%s3 + $0x7c0] sm:$0xff]
    %v566 = vld [vmem:[%s3 + $0x7c8] sm:$0xff]
    %v567 = vld [vmem:[%s3 + $0x7d0] sm:$0xff]
    %v568 = vld [vmem:[%s3 + $0x7d8] sm:$0xff]
    %v569 = vld [vmem:[%s3 + $0x7e0] sm:$0xff]
    %v570 = vld [vmem:[%s3 + $0x7e8] sm:$0xff]
    %v571 = vld [vmem:[%s3 + $0x7f0] sm:$0xff]
    %v572 = vld [vmem:[%s3 + $0x7f8] sm:$0xff]
    %v573 = vld [vmem:[%s4] sm:$0xf]
    %v575 = vperm.slane %v573, 0
    %v576 = vperm.slane %v573, 1
    %v577 = vperm.slane %v573, 2
    %v578 = vperm.slane %v573, 3
    %v839 = vunpack.c.l.b16 %v317
    %v840 = vunpack.c.h.b16 %v317
    %v841 = vunpack.c.l.b16 %v318
    %v842 = vunpack.c.h.b16 %v318
    %v843 = vunpack.c.l.b16 %v319
    %v844 = vunpack.c.h.b16 %v319
    %v845 = vunpack.c.l.b16 %v320
    %v846 = vunpack.c.h.b16 %v320
    %v847 = vunpack.c.l.b16 %v321
    %v848 = vunpack.c.h.b16 %v321
    %v849 = vunpack.c.l.b16 %v322
    %v850 = vunpack.c.h.b16 %v322
    %v851 = vunpack.c.l.b16 %v323
    %v852 = vunpack.c.h.b16 %v323
    %v853 = vunpack.c.l.b16 %v324
    %v854 = vunpack.c.h.b16 %v324
    %v855 = vunpack.c.l.b16 %v325
    %v856 = vunpack.c.h.b16 %v325
    %v857 = vunpack.c.l.b16 %v326
    %v858 = vunpack.c.h.b16 %v326
    %v859 = vunpack.c.l.b16 %v327
    %v860 = vunpack.c.h.b16 %v327
    %v861 = vunpack.c.l.b16 %v328
    %v862 = vunpack.c.h.b16 %v328
    %v863 = vunpack.c.l.b16 %v329
    %v864 = vunpack.c.h.b16 %v329
    %v865 = vunpack.c.l.b16 %v330
    %v866 = vunpack.c.h.b16 %v330
    %v867 = vunpack.c.l.b16 %v331
    %v868 = vunpack.c.h.b16 %v331
    %v869 = vunpack.c.l.b16 %v332
    %v870 = vunpack.c.h.b16 %v332
    %v871 = vunpack.c.l.b16 %v333
    %v872 = vunpack.c.h.b16 %v333
    %v873 = vunpack.c.l.b16 %v334
    %v874 = vunpack.c.h.b16 %v334
    %v875 = vunpack.c.l.b16 %v335
    %v876 = vunpack.c.h.b16 %v335
    %v877 = vunpack.c.l.b16 %v336
    %v878 = vunpack.c.h.b16 %v336
    %v879 = vunpack.c.l.b16 %v337
    %v880 = vunpack.c.h.b16 %v337
    %v881 = vunpack.c.l.b16 %v338
    %v882 = vunpack.c.h.b16 %v338
    %v883 = vunpack.c.l.b16 %v339
    %v884 = vunpack.c.h.b16 %v339
    %v885 = vunpack.c.l.b16 %v340
    %v886 = vunpack.c.h.b16 %v340
    %v887 = vunpack.c.l.b16 %v341
    %v888 = vunpack.c.h.b16 %v341
    %v889 = vunpack.c.l.b16 %v342
    %v890 = vunpack.c.h.b16 %v342
    %v891 = vunpack.c.l.b16 %v343
    %v892 = vunpack.c.h.b16 %v343
    %v893 = vunpack.c.l.b16 %v344
    %v894 = vunpack.c.h.b16 %v344
    %v895 = vunpack.c.l.b16 %v345
    %v896 = vunpack.c.h.b16 %v345
    %v897 = vunpack.c.l.b16 %v346
    %v898 = vunpack.c.h.b16 %v346
    %v899 = vunpack.c.l.b16 %v347
    %v900 = vunpack.c.h.b16 %v347
    %v901 = vunpack.c.l.b16 %v348
    %v902 = vunpack.c.h.b16 %v348
    %v903 = vunpack.c.l.b16 %v349
    %v904 = vunpack.c.h.b16 %v349
    %v905 = vunpack.c.l.b16 %v350
    %v906 = vunpack.c.h.b16 %v350
    %v907 = vunpack.c.l.b16 %v351
    %v908 = vunpack.c.h.b16 %v351
    %v909 = vunpack.c.l.b16 %v352
    %v910 = vunpack.c.h.b16 %v352
    %v911 = vunpack.c.l.b16 %v353
    %v912 = vunpack.c.h.b16 %v353
    %v913 = vunpack.c.l.b16 %v354
    %v914 = vunpack.c.h.b16 %v354
    %v915 = vunpack.c.l.b16 %v355
    %v916 = vunpack.c.h.b16 %v355
    %v917 = vunpack.c.l.b16 %v356
    %v918 = vunpack.c.h.b16 %v356
    %v919 = vunpack.c.l.b16 %v357
    %v920 = vunpack.c.h.b16 %v357
    %v921 = vunpack.c.l.b16 %v358
    %v922 = vunpack.c.h.b16 %v358
    %v923 = vunpack.c.l.b16 %v359
    %v924 = vunpack.c.h.b16 %v359
    %v925 = vunpack.c.l.b16 %v360
    %v926 = vunpack.c.h.b16 %v360
    %v927 = vunpack.c.l.b16 %v361
    %v928 = vunpack.c.h.b16 %v361
    %v929 = vunpack.c.l.b16 %v362
    %v930 = vunpack.c.h.b16 %v362
    %v931 = vunpack.c.l.b16 %v363
    %v932 = vunpack.c.h.b16 %v363
    %v933 = vunpack.c.l.b16 %v364
    %v934 = vunpack.c.h.b16 %v364
    %v935 = vunpack.c.l.b16 %v365
    %v936 = vunpack.c.h.b16 %v365
    %v937 = vunpack.c.l.b16 %v366
    %v938 = vunpack.c.h.b16 %v366
    %v939 = vunpack.c.l.b16 %v367
    %v940 = vunpack.c.h.b16 %v367
    %v941 = vunpack.c.l.b16 %v368
    %v942 = vunpack.c.h.b16 %v368
    %v943 = vunpack.c.l.b16 %v369
    %v944 = vunpack.c.h.b16 %v369
    %v945 = vunpack.c.l.b16 %v370
    %v946 = vunpack.c.h.b16 %v370
    %v947 = vunpack.c.l.b16 %v371
    %v948 = vunpack.c.h.b16 %v371
    %v949 = vunpack.c.l.b16 %v372
    %v950 = vunpack.c.h.b16 %v372
    %v951 = vunpack.c.l.b16 %v373
    %v952 = vunpack.c.h.b16 %v373
    %v953 = vunpack.c.l.b16 %v374
    %v954 = vunpack.c.h.b16 %v374
    %v955 = vunpack.c.l.b16 %v375
    %v956 = vunpack.c.h.b16 %v375
    %v957 = vunpack.c.l.b16 %v376
    %v958 = vunpack.c.h.b16 %v376
    %v959 = vunpack.c.l.b16 %v377
    %v960 = vunpack.c.h.b16 %v377
    %v961 = vunpack.c.l.b16 %v378
    %v962 = vunpack.c.h.b16 %v378
    %v963 = vunpack.c.l.b16 %v379
    %v964 = vunpack.c.h.b16 %v379
    %v965 = vunpack.c.l.b16 %v380
    %v966 = vunpack.c.h.b16 %v380
    %v967 = vunpack.c.l.b16 %v381
    %v968 = vunpack.c.h.b16 %v381
    %v969 = vunpack.c.l.b16 %v382
    %v970 = vunpack.c.h.b16 %v382
    %v971 = vunpack.c.l.b16 %v383
    %v972 = vunpack.c.h.b16 %v383
    %v973 = vunpack.c.l.b16 %v384
    %v974 = vunpack.c.h.b16 %v384
    %v975 = vunpack.c.l.b16 %v385
    %v976 = vunpack.c.h.b16 %v385
    %v977 = vunpack.c.l.b16 %v386
    %v978 = vunpack.c.h.b16 %v386
    %v979 = vunpack.c.l.b16 %v387
    %v980 = vunpack.c.h.b16 %v387
    %v981 = vunpack.c.l.b16 %v388
    %v982 = vunpack.c.h.b16 %v388
    %v983 = vunpack.c.l.b16 %v389
    %v984 = vunpack.c.h.b16 %v389
    %v985 = vunpack.c.l.b16 %v390
    %v986 = vunpack.c.h.b16 %v390
    %v987 = vunpack.c.l.b16 %v391
    %v988 = vunpack.c.h.b16 %v391
    %v989 = vunpack.c.l.b16 %v392
    %v990 = vunpack.c.h.b16 %v392
    %v991 = vunpack.c.l.b16 %v393
    %v992 = vunpack.c.h.b16 %v393
    %v993 = vunpack.c.l.b16 %v394
    %v994 = vunpack.c.h.b16 %v394
    %v995 = vunpack.c.l.b16 %v395
    %v996 = vunpack.c.h.b16 %v395
    %v997 = vunpack.c.l.b16 %v396
    %v998 = vunpack.c.h.b16 %v396
    %v999 = vunpack.c.l.b16 %v397
    %v1000 = vunpack.c.h.b16 %v397
    %v1001 = vunpack.c.l.b16 %v398
    %v1002 = vunpack.c.h.b16 %v398
    %v1003 = vunpack.c.l.b16 %v399
    %v1004 = vunpack.c.h.b16 %v399
    %v1005 = vunpack.c.l.b16 %v400
    %v1006 = vunpack.c.h.b16 %v400
    %v1007 = vunpack.c.l.b16 %v401
    %v1008 = vunpack.c.h.b16 %v401
    %v1009 = vunpack.c.l.b16 %v402
    %v1010 = vunpack.c.h.b16 %v402
    %v1011 = vunpack.c.l.b16 %v403
    %v1012 = vunpack.c.h.b16 %v403
    %v1013 = vunpack.c.l.b16 %v404
    %v1014 = vunpack.c.h.b16 %v404
    %v1015 = vunpack.c.l.b16 %v405
    %v1016 = vunpack.c.h.b16 %v405
    %v1017 = vunpack.c.l.b16 %v406
    %v1018 = vunpack.c.h.b16 %v406
    %v1019 = vunpack.c.l.b16 %v407
    %v1020 = vunpack.c.h.b16 %v407
    %v1021 = vunpack.c.l.b16 %v408
    %v1022 = vunpack.c.h.b16 %v408
    %v1023 = vunpack.c.l.b16 %v409
    %v1024 = vunpack.c.h.b16 %v409
    %v1025 = vunpack.c.l.b16 %v410
    %v1026 = vunpack.c.h.b16 %v410
    %v1027 = vunpack.c.l.b16 %v411
    %v1028 = vunpack.c.h.b16 %v411
    %v1029 = vunpack.c.l.b16 %v412
    %v1030 = vunpack.c.h.b16 %v412
    %v1031 = vunpack.c.l.b16 %v413
    %v1032 = vunpack.c.h.b16 %v413
    %v1033 = vunpack.c.l.b16 %v414
    %v1034 = vunpack.c.h.b16 %v414
    %v1035 = vunpack.c.l.b16 %v415
    %v1036 = vunpack.c.h.b16 %v415
    %v1037 = vunpack.c.l.b16 %v416
    %v1038 = vunpack.c.h.b16 %v416
    %v1039 = vunpack.c.l.b16 %v417
    %v1040 = vunpack.c.h.b16 %v417
    %v1041 = vunpack.c.l.b16 %v418
    %v1042 = vunpack.c.h.b16 %v418
    %v1043 = vunpack.c.l.b16 %v419
    %v1044 = vunpack.c.h.b16 %v419
    %v1045 = vunpack.c.l.b16 %v420
    %v1046 = vunpack.c.h.b16 %v420
    %v1047 = vunpack.c.l.b16 %v421
    %v1048 = vunpack.c.h.b16 %v421
    %v1049 = vunpack.c.l.b16 %v422
    %v1050 = vunpack.c.h.b16 %v422
    %v1051 = vunpack.c.l.b16 %v423
    %v1052 = vunpack.c.h.b16 %v423
    %v1053 = vunpack.c.l.b16 %v424
    %v1054 = vunpack.c.h.b16 %v424
    %v1055 = vunpack.c.l.b16 %v425
    %v1056 = vunpack.c.h.b16 %v425
    %v1057 = vunpack.c.l.b16 %v426
    %v1058 = vunpack.c.h.b16 %v426
    %v1059 = vunpack.c.l.b16 %v427
    %v1060 = vunpack.c.h.b16 %v427
    %v1061 = vunpack.c.l.b16 %v428
    %v1062 = vunpack.c.h.b16 %v428
    %v1063 = vunpack.c.l.b16 %v429
    %v1064 = vunpack.c.h.b16 %v429
    %v1065 = vunpack.c.l.b16 %v430
    %v1066 = vunpack.c.h.b16 %v430
    %v1067 = vunpack.c.l.b16 %v431
    %v1068 = vunpack.c.h.b16 %v431
    %v1069 = vunpack.c.l.b16 %v432
    %v1070 = vunpack.c.h.b16 %v432
    %v1071 = vunpack.c.l.b16 %v433
    %v1072 = vunpack.c.h.b16 %v433
    %v1073 = vunpack.c.l.b16 %v434
    %v1074 = vunpack.c.h.b16 %v434
    %v1075 = vunpack.c.l.b16 %v435
    %v1076 = vunpack.c.h.b16 %v435
    %v1077 = vunpack.c.l.b16 %v436
    %v1078 = vunpack.c.h.b16 %v436
    %v1079 = vunpack.c.l.b16 %v437
    %v1080 = vunpack.c.h.b16 %v437
    %v1081 = vunpack.c.l.b16 %v438
    %v1082 = vunpack.c.h.b16 %v438
    %v1083 = vunpack.c.l.b16 %v439
    %v1084 = vunpack.c.h.b16 %v439
    %v1085 = vunpack.c.l.b16 %v440
    %v1086 = vunpack.c.h.b16 %v440
    %v1087 = vunpack.c.l.b16 %v441
    %v1088 = vunpack.c.h.b16 %v441
    %v1089 = vunpack.c.l.b16 %v442
    %v1090 = vunpack.c.h.b16 %v442
    %v1091 = vunpack.c.l.b16 %v443
    %v1092 = vunpack.c.h.b16 %v443
    %v1093 = vunpack.c.l.b16 %v444
    %v1094 = vunpack.c.h.b16 %v444
    %v1095 = vunpack.c.l.b16 %v445
    %v1096 = vunpack.c.h.b16 %v445
    %v1097 = vunpack.c.l.b16 %v446
    %v1098 = vunpack.c.h.b16 %v446
    %v1099 = vunpack.c.l.b16 %v447
    %v1100 = vunpack.c.h.b16 %v447
    %v1101 = vunpack.c.l.b16 %v448
    %v1102 = vunpack.c.h.b16 %v448
    %v1103 = vunpack.c.l.b16 %v449
    %v1104 = vunpack.c.h.b16 %v449
    %v1105 = vunpack.c.l.b16 %v450
    %v1106 = vunpack.c.h.b16 %v450
    %v1107 = vunpack.c.l.b16 %v451
    %v1108 = vunpack.c.h.b16 %v451
    %v1109 = vunpack.c.l.b16 %v452
    %v1110 = vunpack.c.h.b16 %v452
    %v1111 = vunpack.c.l.b16 %v453
    %v1112 = vunpack.c.h.b16 %v453
    %v1113 = vunpack.c.l.b16 %v454
    %v1114 = vunpack.c.h.b16 %v454
    %v1115 = vunpack.c.l.b16 %v455
    %v1116 = vunpack.c.h.b16 %v455
    %v1117 = vunpack.c.l.b16 %v456
    %v1118 = vunpack.c.h.b16 %v456
    %v1119 = vunpack.c.l.b16 %v457
    %v1120 = vunpack.c.h.b16 %v457
    %v1121 = vunpack.c.l.b16 %v458
    %v1122 = vunpack.c.h.b16 %v458
    %v1123 = vunpack.c.l.b16 %v459
    %v1124 = vunpack.c.h.b16 %v459
    %v1125 = vunpack.c.l.b16 %v460
    %v1126 = vunpack.c.h.b16 %v460
    %v1127 = vunpack.c.l.b16 %v461
    %v1128 = vunpack.c.h.b16 %v461
    %v1129 = vunpack.c.l.b16 %v462
    %v1130 = vunpack.c.h.b16 %v462
    %v1131 = vunpack.c.l.b16 %v463
    %v1132 = vunpack.c.h.b16 %v463
    %v1133 = vunpack.c.l.b16 %v464
    %v1134 = vunpack.c.h.b16 %v464
    %v1135 = vunpack.c.l.b16 %v465
    %v1136 = vunpack.c.h.b16 %v465
    %v1137 = vunpack.c.l.b16 %v466
    %v1138 = vunpack.c.h.b16 %v466
    %v1139 = vunpack.c.l.b16 %v467
    %v1140 = vunpack.c.h.b16 %v467
    %v1141 = vunpack.c.l.b16 %v468
    %v1142 = vunpack.c.h.b16 %v468
    %v1143 = vunpack.c.l.b16 %v469
    %v1144 = vunpack.c.h.b16 %v469
    %v1145 = vunpack.c.l.b16 %v470
    %v1146 = vunpack.c.h.b16 %v470
    %v1147 = vunpack.c.l.b16 %v471
    %v1148 = vunpack.c.h.b16 %v471
    %v1149 = vunpack.c.l.b16 %v472
    %v1150 = vunpack.c.h.b16 %v472
    %v1151 = vunpack.c.l.b16 %v473
    %v1152 = vunpack.c.h.b16 %v473
    %v1153 = vunpack.c.l.b16 %v474
    %v1154 = vunpack.c.h.b16 %v474
    %v1155 = vunpack.c.l.b16 %v475
    %v1156 = vunpack.c.h.b16 %v475
    %v1157 = vunpack.c.l.b16 %v476
    %v1158 = vunpack.c.h.b16 %v476
    %v1159 = vunpack.c.l.b16 %v477
    %v1160 = vunpack.c.h.b16 %v477
    %v1161 = vunpack.c.l.b16 %v478
    %v1162 = vunpack.c.h.b16 %v478
    %v1163 = vunpack.c.l.b16 %v479
    %v1164 = vunpack.c.h.b16 %v479
    %v1165 = vunpack.c.l.b16 %v480
    %v1166 = vunpack.c.h.b16 %v480
    %v1167 = vunpack.c.l.b16 %v481
    %v1168 = vunpack.c.h.b16 %v481
    %v1169 = vunpack.c.l.b16 %v482
    %v1170 = vunpack.c.h.b16 %v482
    %v1171 = vunpack.c.l.b16 %v483
    %v1172 = vunpack.c.h.b16 %v483
    %v1173 = vunpack.c.l.b16 %v484
    %v1174 = vunpack.c.h.b16 %v484
    %v1175 = vunpack.c.l.b16 %v485
    %v1176 = vunpack.c.h.b16 %v485
    %v1177 = vunpack.c.l.b16 %v486
    %v1178 = vunpack.c.h.b16 %v486
    %v1179 = vunpack.c.l.b16 %v487
    %v1180 = vunpack.c.h.b16 %v487
    %v1181 = vunpack.c.l.b16 %v488
    %v1182 = vunpack.c.h.b16 %v488
    %v1183 = vunpack.c.l.b16 %v489
    %v1184 = vunpack.c.h.b16 %v489
    %v1185 = vunpack.c.l.b16 %v490
    %v1186 = vunpack.c.h.b16 %v490
    %v1187 = vunpack.c.l.b16 %v491
    %v1188 = vunpack.c.h.b16 %v491
    %v1189 = vunpack.c.l.b16 %v492
    %v1190 = vunpack.c.h.b16 %v492
    %v1191 = vunpack.c.l.b16 %v493
    %v1192 = vunpack.c.h.b16 %v493
    %v1193 = vunpack.c.l.b16 %v494
    %v1194 = vunpack.c.h.b16 %v494
    %v1195 = vunpack.c.l.b16 %v495
    %v1196 = vunpack.c.h.b16 %v495
    %v1197 = vunpack.c.l.b16 %v496
    %v1198 = vunpack.c.h.b16 %v496
    %v1199 = vunpack.c.l.b16 %v497
    %v1200 = vunpack.c.h.b16 %v497
    %v1201 = vunpack.c.l.b16 %v498
    %v1202 = vunpack.c.h.b16 %v498
    %v1203 = vunpack.c.l.b16 %v499
    %v1204 = vunpack.c.h.b16 %v499
    %v1205 = vunpack.c.l.b16 %v500
    %v1206 = vunpack.c.h.b16 %v500
    %v1207 = vunpack.c.l.b16 %v501
    %v1208 = vunpack.c.h.b16 %v501
    %v1209 = vunpack.c.l.b16 %v502
    %v1210 = vunpack.c.h.b16 %v502
    %v1211 = vunpack.c.l.b16 %v503
    %v1212 = vunpack.c.h.b16 %v503
    %v1213 = vunpack.c.l.b16 %v504
    %v1214 = vunpack.c.h.b16 %v504
    %v1215 = vunpack.c.l.b16 %v505
    %v1216 = vunpack.c.h.b16 %v505
    %v1217 = vunpack.c.l.b16 %v506
    %v1218 = vunpack.c.h.b16 %v506
    %v1219 = vunpack.c.l.b16 %v507
    %v1220 = vunpack.c.h.b16 %v507
    %v1221 = vunpack.c.l.b16 %v508
    %v1222 = vunpack.c.h.b16 %v508
    %v1223 = vunpack.c.l.b16 %v509
    %v1224 = vunpack.c.h.b16 %v509
    %v1225 = vunpack.c.l.b16 %v510
    %v1226 = vunpack.c.h.b16 %v510
    %v1227 = vunpack.c.l.b16 %v511
    %v1228 = vunpack.c.h.b16 %v511
    %v1229 = vunpack.c.l.b16 %v512
    %v1230 = vunpack.c.h.b16 %v512
    %v1231 = vunpack.c.l.b16 %v513
    %v1232 = vunpack.c.h.b16 %v513
    %v1233 = vunpack.c.l.b16 %v514
    %v1234 = vunpack.c.h.b16 %v514
    %v1235 = vunpack.c.l.b16 %v515
    %v1236 = vunpack.c.h.b16 %v515
    %v1237 = vunpack.c.l.b16 %v516
    %v1238 = vunpack.c.h.b16 %v516
    %v1239 = vunpack.c.l.b16 %v517
    %v1240 = vunpack.c.h.b16 %v517
    %v1241 = vunpack.c.l.b16 %v518
    %v1242 = vunpack.c.h.b16 %v518
    %v1243 = vunpack.c.l.b16 %v519
    %v1244 = vunpack.c.h.b16 %v519
    %v1245 = vunpack.c.l.b16 %v520
    %v1246 = vunpack.c.h.b16 %v520
    %v1247 = vunpack.c.l.b16 %v521
    %v1248 = vunpack.c.h.b16 %v521
    %v1249 = vunpack.c.l.b16 %v522
    %v1250 = vunpack.c.h.b16 %v522
    %v1251 = vunpack.c.l.b16 %v523
    %v1252 = vunpack.c.h.b16 %v523
    %v1253 = vunpack.c.l.b16 %v524
    %v1254 = vunpack.c.h.b16 %v524
    %v1255 = vunpack.c.l.b16 %v525
    %v1256 = vunpack.c.h.b16 %v525
    %v1257 = vunpack.c.l.b16 %v526
    %v1258 = vunpack.c.h.b16 %v526
    %v1259 = vunpack.c.l.b16 %v527
    %v1260 = vunpack.c.h.b16 %v527
    %v1261 = vunpack.c.l.b16 %v528
    %v1262 = vunpack.c.h.b16 %v528
    %v1263 = vunpack.c.l.b16 %v529
    %v1264 = vunpack.c.h.b16 %v529
    %v1265 = vunpack.c.l.b16 %v530
    %v1266 = vunpack.c.h.b16 %v530
    %v1267 = vunpack.c.l.b16 %v531
    %v1268 = vunpack.c.h.b16 %v531
    %v1269 = vunpack.c.l.b16 %v532
    %v1270 = vunpack.c.h.b16 %v532
    %v1271 = vunpack.c.l.b16 %v533
    %v1272 = vunpack.c.h.b16 %v533
    %v1273 = vunpack.c.l.b16 %v534
    %v1274 = vunpack.c.h.b16 %v534
    %v1275 = vunpack.c.l.b16 %v535
    %v1276 = vunpack.c.h.b16 %v535
    %v1277 = vunpack.c.l.b16 %v536
    %v1278 = vunpack.c.h.b16 %v536
    %v1279 = vunpack.c.l.b16 %v537
    %v1280 = vunpack.c.h.b16 %v537
    %v1281 = vunpack.c.l.b16 %v538
    %v1282 = vunpack.c.h.b16 %v538
    %v1283 = vunpack.c.l.b16 %v539
    %v1284 = vunpack.c.h.b16 %v539
    %v1285 = vunpack.c.l.b16 %v540
    %v1286 = vunpack.c.h.b16 %v540
    %v1287 = vunpack.c.l.b16 %v541
    %v1288 = vunpack.c.h.b16 %v541
    %v1289 = vunpack.c.l.b16 %v542
    %v1290 = vunpack.c.h.b16 %v542
    %v1291 = vunpack.c.l.b16 %v543
    %v1292 = vunpack.c.h.b16 %v543
    %v1293 = vunpack.c.l.b16 %v544
    %v1294 = vunpack.c.h.b16 %v544
    %v1295 = vunpack.c.l.b16 %v545
    %v1296 = vunpack.c.h.b16 %v545
    %v1297 = vunpack.c.l.b16 %v546
    %v1298 = vunpack.c.h.b16 %v546
    %v1299 = vunpack.c.l.b16 %v547
    %v1300 = vunpack.c.h.b16 %v547
    %v1301 = vunpack.c.l.b16 %v548
    %v1302 = vunpack.c.h.b16 %v548
    %v1303 = vunpack.c.l.b16 %v549
    %v1304 = vunpack.c.h.b16 %v549
    %v1305 = vunpack.c.l.b16 %v550
    %v1306 = vunpack.c.h.b16 %v550
    %v1307 = vunpack.c.l.b16 %v551
    %v1308 = vunpack.c.h.b16 %v551
    %v1309 = vunpack.c.l.b16 %v552
    %v1310 = vunpack.c.h.b16 %v552
    %v1311 = vunpack.c.l.b16 %v553
    %v1312 = vunpack.c.h.b16 %v553
    %v1313 = vunpack.c.l.b16 %v554
    %v1314 = vunpack.c.h.b16 %v554
    %v1315 = vunpack.c.l.b16 %v555
    %v1316 = vunpack.c.h.b16 %v555
    %v1317 = vunpack.c.l.b16 %v556
    %v1318 = vunpack.c.h.b16 %v556
    %v1319 = vunpack.c.l.b16 %v557
    %v1320 = vunpack.c.h.b16 %v557
    %v1321 = vunpack.c.l.b16 %v558
    %v1322 = vunpack.c.h.b16 %v558
    %v1323 = vunpack.c.l.b16 %v559
    %v1324 = vunpack.c.h.b16 %v559
    %v1325 = vunpack.c.l.b16 %v560
    %v1326 = vunpack.c.h.b16 %v560
    %v1327 = vunpack.c.l.b16 %v561
    %v1328 = vunpack.c.h.b16 %v561
    %v1329 = vunpack.c.l.b16 %v562
    %v1330 = vunpack.c.h.b16 %v562
    %v1331 = vunpack.c.l.b16 %v563
    %v1332 = vunpack.c.h.b16 %v563
    %v1333 = vunpack.c.l.b16 %v564
    %v1334 = vunpack.c.h.b16 %v564
    %v1335 = vunpack.c.l.b16 %v565
    %v1336 = vunpack.c.h.b16 %v565
    %v1337 = vunpack.c.l.b16 %v566
    %v1338 = vunpack.c.h.b16 %v566
    %v1339 = vunpack.c.l.b16 %v567
    %v1340 = vunpack.c.h.b16 %v567
    %v1341 = vunpack.c.l.b16 %v568
    %v1342 = vunpack.c.h.b16 %v568
    %v1343 = vunpack.c.l.b16 %v569
    %v1344 = vunpack.c.h.b16 %v569
    %v1345 = vunpack.c.l.b16 %v570
    %v1346 = vunpack.c.h.b16 %v570
    %v1347 = vunpack.c.l.b16 %v571
    %v1348 = vunpack.c.h.b16 %v571
    %v1349 = vunpack.c.l.b16 %v572
    %v1350 = vunpack.c.h.b16 %v572
    %v1351 = vpack.c.b16 %v843, %v839
    %v1352 = vpack.c.b16 %v844, %v840
    %v1353 = vpack.c.b16 %v845, %v841
    %v1354 = vpack.c.b16 %v846, %v842
    %v1355 = vpack.c.b16 %v851, %v847
    %v1356 = vpack.c.b16 %v852, %v848
    %v1357 = vpack.c.b16 %v853, %v849
    %v1358 = vpack.c.b16 %v854, %v850
    %v1359 = vpack.c.b16 %v859, %v855
    %v1360 = vpack.c.b16 %v860, %v856
    %v1361 = vpack.c.b16 %v861, %v857
    %v1362 = vpack.c.b16 %v862, %v858
    %v1363 = vpack.c.b16 %v867, %v863
    %v1364 = vpack.c.b16 %v868, %v864
    %v1365 = vpack.c.b16 %v869, %v865
    %v1366 = vpack.c.b16 %v870, %v866
    %v1367 = vpack.c.b16 %v875, %v871
    %v1368 = vpack.c.b16 %v876, %v872
    %v1369 = vpack.c.b16 %v877, %v873
    %v1370 = vpack.c.b16 %v878, %v874
    %v1371 = vpack.c.b16 %v883, %v879
    %v1372 = vpack.c.b16 %v884, %v880
    %v1373 = vpack.c.b16 %v885, %v881
    %v1374 = vpack.c.b16 %v886, %v882
    %v1375 = vpack.c.b16 %v891, %v887
    %v1376 = vpack.c.b16 %v892, %v888
    %v1377 = vpack.c.b16 %v893, %v889
    %v1378 = vpack.c.b16 %v894, %v890
    %v1379 = vpack.c.b16 %v899, %v895
    %v1380 = vpack.c.b16 %v900, %v896
    %v1381 = vpack.c.b16 %v901, %v897
    %v1382 = vpack.c.b16 %v902, %v898
    %v1383 = vpack.c.b16 %v907, %v903
    %v1384 = vpack.c.b16 %v908, %v904
    %v1385 = vpack.c.b16 %v909, %v905
    %v1386 = vpack.c.b16 %v910, %v906
    %v1387 = vpack.c.b16 %v915, %v911
    %v1388 = vpack.c.b16 %v916, %v912
    %v1389 = vpack.c.b16 %v917, %v913
    %v1390 = vpack.c.b16 %v918, %v914
    %v1391 = vpack.c.b16 %v923, %v919
    %v1392 = vpack.c.b16 %v924, %v920
    %v1393 = vpack.c.b16 %v925, %v921
    %v1394 = vpack.c.b16 %v926, %v922
    %v1395 = vpack.c.b16 %v931, %v927
    %v1396 = vpack.c.b16 %v932, %v928
    %v1397 = vpack.c.b16 %v933, %v929
    %v1398 = vpack.c.b16 %v934, %v930
    %v1399 = vpack.c.b16 %v939, %v935
    %v1400 = vpack.c.b16 %v940, %v936
    %v1401 = vpack.c.b16 %v941, %v937
    %v1402 = vpack.c.b16 %v942, %v938
    %v1403 = vpack.c.b16 %v947, %v943
    %v1404 = vpack.c.b16 %v948, %v944
    %v1405 = vpack.c.b16 %v949, %v945
    %v1406 = vpack.c.b16 %v950, %v946
    %v1407 = vpack.c.b16 %v955, %v951
    %v1408 = vpack.c.b16 %v956, %v952
    %v1409 = vpack.c.b16 %v957, %v953
    %v1410 = vpack.c.b16 %v958, %v954
    %v1411 = vpack.c.b16 %v963, %v959
    %v1412 = vpack.c.b16 %v964, %v960
    %v1413 = vpack.c.b16 %v965, %v961
    %v1414 = vpack.c.b16 %v966, %v962
    %v1415 = vpack.c.b16 %v971, %v967
    %v1416 = vpack.c.b16 %v972, %v968
    %v1417 = vpack.c.b16 %v973, %v969
    %v1418 = vpack.c.b16 %v974, %v970
    %v1419 = vpack.c.b16 %v979, %v975
    %v1420 = vpack.c.b16 %v980, %v976
    %v1421 = vpack.c.b16 %v981, %v977
    %v1422 = vpack.c.b16 %v982, %v978
    %v1423 = vpack.c.b16 %v987, %v983
    %v1424 = vpack.c.b16 %v988, %v984
    %v1425 = vpack.c.b16 %v989, %v985
    %v1426 = vpack.c.b16 %v990, %v986
    %v1427 = vpack.c.b16 %v995, %v991
    %v1428 = vpack.c.b16 %v996, %v992
    %v1429 = vpack.c.b16 %v997, %v993
    %v1430 = vpack.c.b16 %v998, %v994
    %v1431 = vpack.c.b16 %v1003, %v999
    %v1432 = vpack.c.b16 %v1004, %v1000
    %v1433 = vpack.c.b16 %v1005, %v1001
    %v1434 = vpack.c.b16 %v1006, %v1002
    %v1435 = vpack.c.b16 %v1011, %v1007
    %v1436 = vpack.c.b16 %v1012, %v1008
    %v1437 = vpack.c.b16 %v1013, %v1009
    %v1438 = vpack.c.b16 %v1014, %v1010
    %v1439 = vpack.c.b16 %v1019, %v1015
    %v1440 = vpack.c.b16 %v1020, %v1016
    %v1441 = vpack.c.b16 %v1021, %v1017
    %v1442 = vpack.c.b16 %v1022, %v1018
    %v1443 = vpack.c.b16 %v1027, %v1023
    %v1444 = vpack.c.b16 %v1028, %v1024
    %v1445 = vpack.c.b16 %v1029, %v1025
    %v1446 = vpack.c.b16 %v1030, %v1026
    %v1447 = vpack.c.b16 %v1035, %v1031
    %v1448 = vpack.c.b16 %v1036, %v1032
    %v1449 = vpack.c.b16 %v1037, %v1033
    %v1450 = vpack.c.b16 %v1038, %v1034
    %v1451 = vpack.c.b16 %v1043, %v1039
    %v1452 = vpack.c.b16 %v1044, %v1040
    %v1453 = vpack.c.b16 %v1045, %v1041
    %v1454 = vpack.c.b16 %v1046, %v1042
    %v1455 = vpack.c.b16 %v1051, %v1047
    %v1456 = vpack.c.b16 %v1052, %v1048
    %v1457 = vpack.c.b16 %v1053, %v1049
    %v1458 = vpack.c.b16 %v1054, %v1050
    %v1459 = vpack.c.b16 %v1059, %v1055
    %v1460 = vpack.c.b16 %v1060, %v1056
    %v1461 = vpack.c.b16 %v1061, %v1057
    %v1462 = vpack.c.b16 %v1062, %v1058
    %v1463 = vpack.c.b16 %v1067, %v1063
    %v1464 = vpack.c.b16 %v1068, %v1064
    %v1465 = vpack.c.b16 %v1069, %v1065
    %v1466 = vpack.c.b16 %v1070, %v1066
    %v1467 = vpack.c.b16 %v1075, %v1071
    %v1468 = vpack.c.b16 %v1076, %v1072
    %v1469 = vpack.c.b16 %v1077, %v1073
    %v1470 = vpack.c.b16 %v1078, %v1074
    %v1471 = vpack.c.b16 %v1083, %v1079
    %v1472 = vpack.c.b16 %v1084, %v1080
    %v1473 = vpack.c.b16 %v1085, %v1081
    %v1474 = vpack.c.b16 %v1086, %v1082
    %v1475 = vpack.c.b16 %v1091, %v1087
    %v1476 = vpack.c.b16 %v1092, %v1088
    %v1477 = vpack.c.b16 %v1093, %v1089
    %v1478 = vpack.c.b16 %v1094, %v1090
    %v1479 = vpack.c.b16 %v1099, %v1095
    %v1480 = vpack.c.b16 %v1100, %v1096
    %v1481 = vpack.c.b16 %v1101, %v1097
    %v1482 = vpack.c.b16 %v1102, %v1098
    %v1483 = vpack.c.b16 %v1107, %v1103
    %v1484 = vpack.c.b16 %v1108, %v1104
    %v1485 = vpack.c.b16 %v1109, %v1105
    %v1486 = vpack.c.b16 %v1110, %v1106
    %v1487 = vpack.c.b16 %v1115, %v1111
    %v1488 = vpack.c.b16 %v1116, %v1112
    %v1489 = vpack.c.b16 %v1117, %v1113
    %v1490 = vpack.c.b16 %v1118, %v1114
    %v1491 = vpack.c.b16 %v1123, %v1119
    %v1492 = vpack.c.b16 %v1124, %v1120
    %v1493 = vpack.c.b16 %v1125, %v1121
    %v1494 = vpack.c.b16 %v1126, %v1122
    %v1495 = vpack.c.b16 %v1131, %v1127
    %v1496 = vpack.c.b16 %v1132, %v1128
    %v1497 = vpack.c.b16 %v1133, %v1129
    %v1498 = vpack.c.b16 %v1134, %v1130
    %v1499 = vpack.c.b16 %v1139, %v1135
    %v1500 = vpack.c.b16 %v1140, %v1136
    %v1501 = vpack.c.b16 %v1141, %v1137
    %v1502 = vpack.c.b16 %v1142, %v1138
    %v1503 = vpack.c.b16 %v1147, %v1143
    %v1504 = vpack.c.b16 %v1148, %v1144
    %v1505 = vpack.c.b16 %v1149, %v1145
    %v1506 = vpack.c.b16 %v1150, %v1146
    %v1507 = vpack.c.b16 %v1155, %v1151
    %v1508 = vpack.c.b16 %v1156, %v1152
    %v1509 = vpack.c.b16 %v1157, %v1153
    %v1510 = vpack.c.b16 %v1158, %v1154
    %v1511 = vpack.c.b16 %v1163, %v1159
    %v1512 = vpack.c.b16 %v1164, %v1160
    %v1513 = vpack.c.b16 %v1165, %v1161
    %v1514 = vpack.c.b16 %v1166, %v1162
    %v1515 = vpack.c.b16 %v1171, %v1167
    %v1516 = vpack.c.b16 %v1172, %v1168
    %v1517 = vpack.c.b16 %v1173, %v1169
    %v1518 = vpack.c.b16 %v1174, %v1170
    %v1519 = vpack.c.b16 %v1179, %v1175
    %v1520 = vpack.c.b16 %v1180, %v1176
    %v1521 = vpack.c.b16 %v1181, %v1177
    %v1522 = vpack.c.b16 %v1182, %v1178
    %v1523 = vpack.c.b16 %v1187, %v1183
    %v1524 = vpack.c.b16 %v1188, %v1184
    %v1525 = vpack.c.b16 %v1189, %v1185
    %v1526 = vpack.c.b16 %v1190, %v1186
    %v1527 = vpack.c.b16 %v1195, %v1191
    %v1528 = vpack.c.b16 %v1196, %v1192
    %v1529 = vpack.c.b16 %v1197, %v1193
    %v1530 = vpack.c.b16 %v1198, %v1194
    %v1531 = vpack.c.b16 %v1203, %v1199
    %v1532 = vpack.c.b16 %v1204, %v1200
    %v1533 = vpack.c.b16 %v1205, %v1201
    %v1534 = vpack.c.b16 %v1206, %v1202
    %v1535 = vpack.c.b16 %v1211, %v1207
    %v1536 = vpack.c.b16 %v1212, %v1208
    %v1537 = vpack.c.b16 %v1213, %v1209
    %v1538 = vpack.c.b16 %v1214, %v1210
    %v1539 = vpack.c.b16 %v1219, %v1215
    %v1540 = vpack.c.b16 %v1220, %v1216
    %v1541 = vpack.c.b16 %v1221, %v1217
    %v1542 = vpack.c.b16 %v1222, %v1218
    %v1543 = vpack.c.b16 %v1227, %v1223
    %v1544 = vpack.c.b16 %v1228, %v1224
    %v1545 = vpack.c.b16 %v1229, %v1225
    %v1546 = vpack.c.b16 %v1230, %v1226
    %v1547 = vpack.c.b16 %v1235, %v1231
    %v1548 = vpack.c.b16 %v1236, %v1232
    %v1549 = vpack.c.b16 %v1237, %v1233
    %v1550 = vpack.c.b16 %v1238, %v1234
    %v1551 = vpack.c.b16 %v1243, %v1239
    %v1552 = vpack.c.b16 %v1244, %v1240
    %v1553 = vpack.c.b16 %v1245, %v1241
    %v1554 = vpack.c.b16 %v1246, %v1242
    %v1555 = vpack.c.b16 %v1251, %v1247
    %v1556 = vpack.c.b16 %v1252, %v1248
    %v1557 = vpack.c.b16 %v1253, %v1249
    %v1558 = vpack.c.b16 %v1254, %v1250
    %v1559 = vpack.c.b16 %v1259, %v1255
    %v1560 = vpack.c.b16 %v1260, %v1256
    %v1561 = vpack.c.b16 %v1261, %v1257
    %v1562 = vpack.c.b16 %v1262, %v1258
    %v1563 = vpack.c.b16 %v1267, %v1263
    %v1564 = vpack.c.b16 %v1268, %v1264
    %v1565 = vpack.c.b16 %v1269, %v1265
    %v1566 = vpack.c.b16 %v1270, %v1266
    %v1567 = vpack.c.b16 %v1275, %v1271
    %v1568 = vpack.c.b16 %v1276, %v1272
    %v1569 = vpack.c.b16 %v1277, %v1273
    %v1570 = vpack.c.b16 %v1278, %v1274
    %v1571 = vpack.c.b16 %v1283, %v1279
    %v1572 = vpack.c.b16 %v1284, %v1280
    %v1573 = vpack.c.b16 %v1285, %v1281
    %v1574 = vpack.c.b16 %v1286, %v1282
    %v1575 = vpack.c.b16 %v1291, %v1287
    %v1576 = vpack.c.b16 %v1292, %v1288
    %v1577 = vpack.c.b16 %v1293, %v1289
    %v1578 = vpack.c.b16 %v1294, %v1290
    %v1579 = vpack.c.b16 %v1299, %v1295
    %v1580 = vpack.c.b16 %v1300, %v1296
    %v1581 = vpack.c.b16 %v1301, %v1297
    %v1582 = vpack.c.b16 %v1302, %v1298
    %v1583 = vpack.c.b16 %v1307, %v1303
    %v1584 = vpack.c.b16 %v1308, %v1304
    %v1585 = vpack.c.b16 %v1309, %v1305
    %v1586 = vpack.c.b16 %v1310, %v1306
    %v1587 = vpack.c.b16 %v1315, %v1311
    %v1588 = vpack.c.b16 %v1316, %v1312
    %v1589 = vpack.c.b16 %v1317, %v1313
    %v1590 = vpack.c.b16 %v1318, %v1314
    %v1591 = vpack.c.b16 %v1323, %v1319
    %v1592 = vpack.c.b16 %v1324, %v1320
    %v1593 = vpack.c.b16 %v1325, %v1321
    %v1594 = vpack.c.b16 %v1326, %v1322
    %v1595 = vpack.c.b16 %v1331, %v1327
    %v1596 = vpack.c.b16 %v1332, %v1328
    %v1597 = vpack.c.b16 %v1333, %v1329
    %v1598 = vpack.c.b16 %v1334, %v1330
    %v1599 = vpack.c.b16 %v1339, %v1335
    %v1600 = vpack.c.b16 %v1340, %v1336
    %v1601 = vpack.c.b16 %v1341, %v1337
    %v1602 = vpack.c.b16 %v1342, %v1338
    %v1603 = vpack.c.b16 %v1347, %v1343
    %v1604 = vpack.c.b16 %v1348, %v1344
    %v1605 = vpack.c.b16 %v1349, %v1345
    %v1606 = vpack.c.b16 %v1350, %v1346
    %1863 = vmatpush.bf16.msra.mxu0 %v1379
    %1864 = vmatpush.bf16.msra.mxu0 %v1375
    %1865 = vmatpush.bf16.msra.mxu0 %v1371
    %1866 = vmatpush.bf16.msra.mxu0 %v1367
    %1867 = vmatpush.bf16.msra.mxu0 %v1363
    %1868 = vmatpush.bf16.msra.mxu0 %v1359
    %1869 = vmatpush.bf16.msra.mxu0 %v1355
    %1870 = vmatpush.bf16.msra.mxu0 %v1351
    %1871 = vmatmul.bf16.gmra.mxu0 %v309
    %v1872 = vpop.f32.mrf.mxu0
    %v1873 = vadd.f32 %v575, %v1872
    %v1874 = vpop.f32.mrf.mxu0
    %1875 = vdwg.mxu0
    %1876 = vmatpush.bf16.msra.mxu0 %v1411
    %1877 = vmatpush.bf16.msra.mxu0 %v1407
    %1878 = vmatpush.bf16.msra.mxu0 %v1403
    %1879 = vmatpush.bf16.msra.mxu0 %v1399
    %1880 = vmatpush.bf16.msra.mxu0 %v1395
    %1881 = vmatpush.bf16.msra.mxu0 %v1391
    %1882 = vmatpush.bf16.msra.mxu0 %v1387
    %1883 = vmatpush.bf16.msra.mxu0 %v1383
    %1884 = vmatmul.bf16.gmra.mxu0 %v310
    %v1885 = vpop.f32.mrf.mxu0
    %v1886 = vadd.f32 %v1873, %v1885
    %v1887 = vpop.f32.mrf.mxu0
    %1888 = vdwg.mxu0
    %1889 = vmatpush.bf16.msra.mxu0 %v1443
    %1890 = vmatpush.bf16.msra.mxu0 %v1439
    %1891 = vmatpush.bf16.msra.mxu0 %v1435
    %1892 = vmatpush.bf16.msra.mxu0 %v1431
    %1893 = vmatpush.bf16.msra.mxu0 %v1427
    %1894 = vmatpush.bf16.msra.mxu0 %v1423
    %1895 = vmatpush.bf16.msra.mxu0 %v1419
    %1896 = vmatpush.bf16.msra.mxu0 %v1415
    %1897 = vmatmul.bf16.gmra.mxu0 %v311
    %v1898 = vpop.f32.mrf.mxu0
    %v1899 = vadd.f32 %v1886, %v1898
    %v1900 = vpop.f32.mrf.mxu0
    %1901 = vdwg.mxu0
    %1902 = vmatpush.bf16.msra.mxu0 %v1475
    %1903 = vmatpush.bf16.msra.mxu0 %v1471
    %1904 = vmatpush.bf16.msra.mxu0 %v1467
    %1905 = vmatpush.bf16.msra.mxu0 %v1463
    %1906 = vmatpush.bf16.msra.mxu0 %v1459
    %1907 = vmatpush.bf16.msra.mxu0 %v1455
    %1908 = vmatpush.bf16.msra.mxu0 %v1451
    %1909 = vmatpush.bf16.msra.mxu0 %v1447
    %1910 = vmatmul.bf16.gmra.mxu0 %v312
    %v1911 = vpop.f32.mrf.mxu0
    %v1912 = vadd.f32 %v1899, %v1911
    %v1913 = vpop.f32.mrf.mxu0
    %1914 = vdwg.mxu0
    %1915 = vmatpush.bf16.msra.mxu0 %v1507
    %1916 = vmatpush.bf16.msra.mxu0 %v1503
    %1917 = vmatpush.bf16.msra.mxu0 %v1499
    %1918 = vmatpush.bf16.msra.mxu0 %v1495
    %1919 = vmatpush.bf16.msra.mxu0 %v1491
    %1920 = vmatpush.bf16.msra.mxu0 %v1487
    %1921 = vmatpush.bf16.msra.mxu0 %v1483
    %1922 = vmatpush.bf16.msra.mxu0 %v1479
    %1923 = vmatmul.bf16.gmra.mxu0 %v313
    %v1924 = vpop.f32.mrf.mxu0
    %v1925 = vadd.f32 %v1912, %v1924
    %v1926 = vpop.f32.mrf.mxu0
    %1927 = vdwg.mxu0
    %1928 = vmatpush.bf16.msra.mxu0 %v1539
    %1929 = vmatpush.bf16.msra.mxu0 %v1535
    %1930 = vmatpush.bf16.msra.mxu0 %v1531
    %1931 = vmatpush.bf16.msra.mxu0 %v1527
    %1932 = vmatpush.bf16.msra.mxu0 %v1523
    %1933 = vmatpush.bf16.msra.mxu0 %v1519
    %1934 = vmatpush.bf16.msra.mxu0 %v1515
    %1935 = vmatpush.bf16.msra.mxu0 %v1511
    %1936 = vmatmul.bf16.gmra.mxu0 %v314
    %v1937 = vpop.f32.mrf.mxu0
    %v1938 = vadd.f32 %v1925, %v1937
    %v1939 = vpop.f32.mrf.mxu0
    %1940 = vdwg.mxu0
    %1941 = vmatpush.bf16.msra.mxu0 %v1571
    %1942 = vmatpush.bf16.msra.mxu0 %v1567
    %1943 = vmatpush.bf16.msra.mxu0 %v1563
    %1944 = vmatpush.bf16.msra.mxu0 %v1559
    %1945 = vmatpush.bf16.msra.mxu0 %v1555
    %1946 = vmatpush.bf16.msra.mxu0 %v1551
    %1947 = vmatpush.bf16.msra.mxu0 %v1547
    %1948 = vmatpush.bf16.msra.mxu0 %v1543
    %1949 = vmatmul.bf16.gmra.mxu0 %v315
    %v1950 = vpop.f32.mrf.mxu0
    %v1951 = vadd.f32 %v1938, %v1950
    %v1952 = vpop.f32.mrf.mxu0
    %1953 = vdwg.mxu0
    %1954 = vmatpush.bf16.msra.mxu0 %v1603
    %1955 = vmatpush.bf16.msra.mxu0 %v1599
    %1956 = vmatpush.bf16.msra.mxu0 %v1595
    %1957 = vmatpush.bf16.msra.mxu0 %v1591
    %1958 = vmatpush.bf16.msra.mxu0 %v1587
    %1959 = vmatpush.bf16.msra.mxu0 %v1583
    %1960 = vmatpush.bf16.msra.mxu0 %v1579
    %1961 = vmatpush.bf16.msra.mxu0 %v1575
    %1962 = vmatmul.bf16.gmra.mxu0 %v316
    %v1963 = vpop.f32.mrf.mxu0
    %v1964 = vadd.f32 %v1951, %v1963
    %v1965 = vpop.f32.mrf.mxu0
    %1966 = vdwg.mxu0
    %1967 = vmatpush.bf16.msra.mxu0 %v1380
    %1968 = vmatpush.bf16.msra.mxu0 %v1376
    %1969 = vmatpush.bf16.msra.mxu0 %v1372
    %1970 = vmatpush.bf16.msra.mxu0 %v1368
    %1971 = vmatpush.bf16.msra.mxu0 %v1364
    %1972 = vmatpush.bf16.msra.mxu0 %v1360
    %1973 = vmatpush.bf16.msra.mxu0 %v1356
    %1974 = vmatpush.bf16.msra.mxu0 %v1352
    %1975 = vmatmul.bf16.gmra.mxu0 %v309
    %v1976 = vpop.f32.mrf.mxu0
    %v1977 = vadd.f32 %v576, %v1976
    %v1978 = vpop.f32.mrf.mxu0
    %1979 = vdwg.mxu0
    %1980 = vmatpush.bf16.msra.mxu0 %v1412
    %1981 = vmatpush.bf16.msra.mxu0 %v1408
    %1982 = vmatpush.bf16.msra.mxu0 %v1404
    %1983 = vmatpush.bf16.msra.mxu0 %v1400
    %1984 = vmatpush.bf16.msra.mxu0 %v1396
    %1985 = vmatpush.bf16.msra.mxu0 %v1392
    %1986 = vmatpush.bf16.msra.mxu0 %v1388
    %1987 = vmatpush.bf16.msra.mxu0 %v1384
    %1988 = vmatmul.bf16.gmra.mxu0 %v310
    %v1989 = vpop.f32.mrf.mxu0
    %v1990 = vadd.f32 %v1977, %v1989
    %v1991 = vpop.f32.mrf.mxu0
    %1992 = vdwg.mxu0
    %1993 = vmatpush.bf16.msra.mxu0 %v1444
    %1994 = vmatpush.bf16.msra.mxu0 %v1440
    %1995 = vmatpush.bf16.msra.mxu0 %v1436
    %1996 = vmatpush.bf16.msra.mxu0 %v1432
    %1997 = vmatpush.bf16.msra.mxu0 %v1428
    %1998 = vmatpush.bf16.msra.mxu0 %v1424
    %1999 = vmatpush.bf16.msra.mxu0 %v1420
    %2000 = vmatpush.bf16.msra.mxu0 %v1416
    %2001 = vmatmul.bf16.gmra.mxu0 %v311
    %v2002 = vpop.f32.mrf.mxu0
    %v2003 = vadd.f32 %v1990, %v2002
    %v2004 = vpop.f32.mrf.mxu0
    %2005 = vdwg.mxu0
    %2006 = vmatpush.bf16.msra.mxu0 %v1476
    %2007 = vmatpush.bf16.msra.mxu0 %v1472
    %2008 = vmatpush.bf16.msra.mxu0 %v1468
    %2009 = vmatpush.bf16.msra.mxu0 %v1464
    %2010 = vmatpush.bf16.msra.mxu0 %v1460
    %2011 = vmatpush.bf16.msra.mxu0 %v1456
    %2012 = vmatpush.bf16.msra.mxu0 %v1452
    %2013 = vmatpush.bf16.msra.mxu0 %v1448
    %2014 = vmatmul.bf16.gmra.mxu0 %v312
    %v2015 = vpop.f32.mrf.mxu0
    %v2016 = vadd.f32 %v2003, %v2015
    %v2017 = vpop.f32.mrf.mxu0
    %2018 = vdwg.mxu0
    %2019 = vmatpush.bf16.msra.mxu0 %v1508
    %2020 = vmatpush.bf16.msra.mxu0 %v1504
    %2021 = vmatpush.bf16.msra.mxu0 %v1500
    %2022 = vmatpush.bf16.msra.mxu0 %v1496
    %2023 = vmatpush.bf16.msra.mxu0 %v1492
    %2024 = vmatpush.bf16.msra.mxu0 %v1488
    %2025 = vmatpush.bf16.msra.mxu0 %v1484
    %2026 = vmatpush.bf16.msra.mxu0 %v1480
    %2027 = vmatmul.bf16.gmra.mxu0 %v313
    %v2028 = vpop.f32.mrf.mxu0
    %v2029 = vadd.f32 %v2016, %v2028
    %v2030 = vpop.f32.mrf.mxu0
    %2031 = vdwg.mxu0
    %2032 = vmatpush.bf16.msra.mxu0 %v1540
    %2033 = vmatpush.bf16.msra.mxu0 %v1536
    %2034 = vmatpush.bf16.msra.mxu0 %v1532
    %2035 = vmatpush.bf16.msra.mxu0 %v1528
    %2036 = vmatpush.bf16.msra.mxu0 %v1524
    %2037 = vmatpush.bf16.msra.mxu0 %v1520
    %2038 = vmatpush.bf16.msra.mxu0 %v1516
    %2039 = vmatpush.bf16.msra.mxu0 %v1512
    %2040 = vmatmul.bf16.gmra.mxu0 %v314
    %v2041 = vpop.f32.mrf.mxu0
    %v2042 = vadd.f32 %v2029, %v2041
    %v2043 = vpop.f32.mrf.mxu0
    %2044 = vdwg.mxu0
    %2045 = vmatpush.bf16.msra.mxu0 %v1572
    %2046 = vmatpush.bf16.msra.mxu0 %v1568
    %2047 = vmatpush.bf16.msra.mxu0 %v1564
    %2048 = vmatpush.bf16.msra.mxu0 %v1560
    %2049 = vmatpush.bf16.msra.mxu0 %v1556
    %2050 = vmatpush.bf16.msra.mxu0 %v1552
    %2051 = vmatpush.bf16.msra.mxu0 %v1548
    %2052 = vmatpush.bf16.msra.mxu0 %v1544
    %2053 = vmatmul.bf16.gmra.mxu0 %v315
    %v2054 = vpop.f32.mrf.mxu0
    %v2055 = vadd.f32 %v2042, %v2054
    %v2056 = vpop.f32.mrf.mxu0
    %2057 = vdwg.mxu0
    %2058 = vmatpush.bf16.msra.mxu0 %v1604
    %2059 = vmatpush.bf16.msra.mxu0 %v1600
    %2060 = vmatpush.bf16.msra.mxu0 %v1596
    %2061 = vmatpush.bf16.msra.mxu0 %v1592
    %2062 = vmatpush.bf16.msra.mxu0 %v1588
    %2063 = vmatpush.bf16.msra.mxu0 %v1584
    %2064 = vmatpush.bf16.msra.mxu0 %v1580
    %2065 = vmatpush.bf16.msra.mxu0 %v1576
    %2066 = vmatmul.bf16.gmra.mxu0 %v316
    %v2067 = vpop.f32.mrf.mxu0
    %v2068 = vadd.f32 %v2055, %v2067
    %v2069 = vpop.f32.mrf.mxu0
    %2070 = vdwg.mxu0
    %2071 = vmatpush.bf16.msra.mxu0 %v1381
    %2072 = vmatpush.bf16.msra.mxu0 %v1377
    %2073 = vmatpush.bf16.msra.mxu0 %v1373
    %2074 = vmatpush.bf16.msra.mxu0 %v1369
    %2075 = vmatpush.bf16.msra.mxu0 %v1365
    %2076 = vmatpush.bf16.msra.mxu0 %v1361
    %2077 = vmatpush.bf16.msra.mxu0 %v1357
    %2078 = vmatpush.bf16.msra.mxu0 %v1353
    %2079 = vmatmul.bf16.gmra.mxu0 %v309
    %v2080 = vpop.f32.mrf.mxu0
    %v2081 = vadd.f32 %v577, %v2080
    %v2082 = vpop.f32.mrf.mxu0
    %2083 = vdwg.mxu0
    %2084 = vmatpush.bf16.msra.mxu0 %v1413
    %2085 = vmatpush.bf16.msra.mxu0 %v1409
    %2086 = vmatpush.bf16.msra.mxu0 %v1405
    %2087 = vmatpush.bf16.msra.mxu0 %v1401
    %2088 = vmatpush.bf16.msra.mxu0 %v1397
    %2089 = vmatpush.bf16.msra.mxu0 %v1393
    %2090 = vmatpush.bf16.msra.mxu0 %v1389
    %2091 = vmatpush.bf16.msra.mxu0 %v1385
    %2092 = vmatmul.bf16.gmra.mxu0 %v310
    %v2093 = vpop.f32.mrf.mxu0
    %v2094 = vadd.f32 %v2081, %v2093
    %v2095 = vpop.f32.mrf.mxu0
    %2096 = vdwg.mxu0
    %2097 = vmatpush.bf16.msra.mxu0 %v1445
    %2098 = vmatpush.bf16.msra.mxu0 %v1441
    %2099 = vmatpush.bf16.msra.mxu0 %v1437
    %2100 = vmatpush.bf16.msra.mxu0 %v1433
    %2101 = vmatpush.bf16.msra.mxu0 %v1429
    %2102 = vmatpush.bf16.msra.mxu0 %v1425
    %2103 = vmatpush.bf16.msra.mxu0 %v1421
    %2104 = vmatpush.bf16.msra.mxu0 %v1417
    %2105 = vmatmul.bf16.gmra.mxu0 %v311
    %v2106 = vpop.f32.mrf.mxu0
    %v2107 = vadd.f32 %v2094, %v2106
    %v2108 = vpop.f32.mrf.mxu0
    %2109 = vdwg.mxu0
    %2110 = vmatpush.bf16.msra.mxu0 %v1477
    %2111 = vmatpush.bf16.msra.mxu0 %v1473
    %2112 = vmatpush.bf16.msra.mxu0 %v1469
    %2113 = vmatpush.bf16.msra.mxu0 %v1465
    %2114 = vmatpush.bf16.msra.mxu0 %v1461
    %2115 = vmatpush.bf16.msra.mxu0 %v1457
    %2116 = vmatpush.bf16.msra.mxu0 %v1453
    %2117 = vmatpush.bf16.msra.mxu0 %v1449
    %2118 = vmatmul.bf16.gmra.mxu0 %v312
    %v2119 = vpop.f32.mrf.mxu0
    %v2120 = vadd.f32 %v2107, %v2119
    %v2121 = vpop.f32.mrf.mxu0
    %2122 = vdwg.mxu0
    %2123 = vmatpush.bf16.msra.mxu0 %v1509
    %2124 = vmatpush.bf16.msra.mxu0 %v1505
    %2125 = vmatpush.bf16.msra.mxu0 %v1501
    %2126 = vmatpush.bf16.msra.mxu0 %v1497
    %2127 = vmatpush.bf16.msra.mxu0 %v1493
    %2128 = vmatpush.bf16.msra.mxu0 %v1489
    %2129 = vmatpush.bf16.msra.mxu0 %v1485
    %2130 = vmatpush.bf16.msra.mxu0 %v1481
    %2131 = vmatmul.bf16.gmra.mxu0 %v313
    %v2132 = vpop.f32.mrf.mxu0
    %v2133 = vadd.f32 %v2120, %v2132
    %v2134 = vpop.f32.mrf.mxu0
    %2135 = vdwg.mxu0
    %2136 = vmatpush.bf16.msra.mxu0 %v1541
    %2137 = vmatpush.bf16.msra.mxu0 %v1537
    %2138 = vmatpush.bf16.msra.mxu0 %v1533
    %2139 = vmatpush.bf16.msra.mxu0 %v1529
    %2140 = vmatpush.bf16.msra.mxu0 %v1525
    %2141 = vmatpush.bf16.msra.mxu0 %v1521
    %2142 = vmatpush.bf16.msra.mxu0 %v1517
    %2143 = vmatpush.bf16.msra.mxu0 %v1513
    %2144 = vmatmul.bf16.gmra.mxu0 %v314
    %v2145 = vpop.f32.mrf.mxu0
    %v2146 = vadd.f32 %v2133, %v2145
    %v2147 = vpop.f32.mrf.mxu0
    %2148 = vdwg.mxu0
    %2149 = vmatpush.bf16.msra.mxu0 %v1573
    %2150 = vmatpush.bf16.msra.mxu0 %v1569
    %2151 = vmatpush.bf16.msra.mxu0 %v1565
    %2152 = vmatpush.bf16.msra.mxu0 %v1561
    %2153 = vmatpush.bf16.msra.mxu0 %v1557
    %2154 = vmatpush.bf16.msra.mxu0 %v1553
    %2155 = vmatpush.bf16.msra.mxu0 %v1549
    %2156 = vmatpush.bf16.msra.mxu0 %v1545
    %2157 = vmatmul.bf16.gmra.mxu0 %v315
    %v2158 = vpop.f32.mrf.mxu0
    %v2159 = vadd.f32 %v2146, %v2158
    %v2160 = vpop.f32.mrf.mxu0
    %2161 = vdwg.mxu0
    %2162 = vmatpush.bf16.msra.mxu0 %v1605
    %2163 = vmatpush.bf16.msra.mxu0 %v1601
    %2164 = vmatpush.bf16.msra.mxu0 %v1597
    %2165 = vmatpush.bf16.msra.mxu0 %v1593
    %2166 = vmatpush.bf16.msra.mxu0 %v1589
    %2167 = vmatpush.bf16.msra.mxu0 %v1585
    %2168 = vmatpush.bf16.msra.mxu0 %v1581
    %2169 = vmatpush.bf16.msra.mxu0 %v1577
    %2170 = vmatmul.bf16.gmra.mxu0 %v316
    %v2171 = vpop.f32.mrf.mxu0
    %v2172 = vadd.f32 %v2159, %v2171
    %v2173 = vpop.f32.mrf.mxu0
    %2174 = vdwg.mxu0
    %2175 = vmatpush.bf16.msra.mxu0 %v1382
    %2176 = vmatpush.bf16.msra.mxu0 %v1378
    %2177 = vmatpush.bf16.msra.mxu0 %v1374
    %2178 = vmatpush.bf16.msra.mxu0 %v1370
    %2179 = vmatpush.bf16.msra.mxu0 %v1366
    %2180 = vmatpush.bf16.msra.mxu0 %v1362
    %2181 = vmatpush.bf16.msra.mxu0 %v1358
    %2182 = vmatpush.bf16.msra.mxu0 %v1354
    %2183 = vmatmul.bf16.gmra.mxu0 %v309
    %v2184 = vpop.f32.mrf.mxu0
    %v2185 = vadd.f32 %v578, %v2184
    %v2186 = vpop.f32.mrf.mxu0
    %2187 = vdwg.mxu0
    %2188 = vmatpush.bf16.msra.mxu0 %v1414
    %2189 = vmatpush.bf16.msra.mxu0 %v1410
    %2190 = vmatpush.bf16.msra.mxu0 %v1406
    %2191 = vmatpush.bf16.msra.mxu0 %v1402
    %2192 = vmatpush.bf16.msra.mxu0 %v1398
    %2193 = vmatpush.bf16.msra.mxu0 %v1394
    %2194 = vmatpush.bf16.msra.mxu0 %v1390
    %2195 = vmatpush.bf16.msra.mxu0 %v1386
    %2196 = vmatmul.bf16.gmra.mxu0 %v310
    %v2197 = vpop.f32.mrf.mxu0
    %v2198 = vadd.f32 %v2185, %v2197
    %v2199 = vpop.f32.mrf.mxu0
    %2200 = vdwg.mxu0
    %2201 = vmatpush.bf16.msra.mxu0 %v1446
    %2202 = vmatpush.bf16.msra.mxu0 %v1442
    %2203 = vmatpush.bf16.msra.mxu0 %v1438
    %2204 = vmatpush.bf16.msra.mxu0 %v1434
    %2205 = vmatpush.bf16.msra.mxu0 %v1430
    %2206 = vmatpush.bf16.msra.mxu0 %v1426
    %2207 = vmatpush.bf16.msra.mxu0 %v1422
    %2208 = vmatpush.bf16.msra.mxu0 %v1418
    %2209 = vmatmul.bf16.gmra.mxu0 %v311
    %v2210 = vpop.f32.mrf.mxu0
    %v2211 = vadd.f32 %v2198, %v2210
    %v2212 = vpop.f32.mrf.mxu0
    %2213 = vdwg.mxu0
    %2214 = vmatpush.bf16.msra.mxu0 %v1478
    %2215 = vmatpush.bf16.msra.mxu0 %v1474
    %2216 = vmatpush.bf16.msra.mxu0 %v1470
    %2217 = vmatpush.bf16.msra.mxu0 %v1466
    %2218 = vmatpush.bf16.msra.mxu0 %v1462
    %2219 = vmatpush.bf16.msra.mxu0 %v1458
    %2220 = vmatpush.bf16.msra.mxu0 %v1454
    %2221 = vmatpush.bf16.msra.mxu0 %v1450
    %2222 = vmatmul.bf16.gmra.mxu0 %v312
    %v2223 = vpop.f32.mrf.mxu0
    %v2224 = vadd.f32 %v2211, %v2223
    %v2225 = vpop.f32.mrf.mxu0
    %2226 = vdwg.mxu0
    %2227 = vmatpush.bf16.msra.mxu0 %v1510
    %2228 = vmatpush.bf16.msra.mxu0 %v1506
    %2229 = vmatpush.bf16.msra.mxu0 %v1502
    %2230 = vmatpush.bf16.msra.mxu0 %v1498
    %2231 = vmatpush.bf16.msra.mxu0 %v1494
    %2232 = vmatpush.bf16.msra.mxu0 %v1490
    %2233 = vmatpush.bf16.msra.mxu0 %v1486
    %2234 = vmatpush.bf16.msra.mxu0 %v1482
    %2235 = vmatmul.bf16.gmra.mxu0 %v313
    %v2236 = vpop.f32.mrf.mxu0
    %v2237 = vadd.f32 %v2224, %v2236
    %v2238 = vpop.f32.mrf.mxu0
    %2239 = vdwg.mxu0
    %2240 = vmatpush.bf16.msra.mxu0 %v1542
    %2241 = vmatpush.bf16.msra.mxu0 %v1538
    %2242 = vmatpush.bf16.msra.mxu0 %v1534
    %2243 = vmatpush.bf16.msra.mxu0 %v1530
    %2244 = vmatpush.bf16.msra.mxu0 %v1526
    %2245 = vmatpush.bf16.msra.mxu0 %v1522
    %2246 = vmatpush.bf16.msra.mxu0 %v1518
    %2247 = vmatpush.bf16.msra.mxu0 %v1514
    %2248 = vmatmul.bf16.gmra.mxu0 %v314
    %v2249 = vpop.f32.mrf.mxu0
    %v2250 = vadd.f32 %v2237, %v2249
    %v2251 = vpop.f32.mrf.mxu0
    %2252 = vdwg.mxu0
    %2253 = vmatpush.bf16.msra.mxu0 %v1574
    %2254 = vmatpush.bf16.msra.mxu0 %v1570
    %2255 = vmatpush.bf16.msra.mxu0 %v1566
    %2256 = vmatpush.bf16.msra.mxu0 %v1562
    %2257 = vmatpush.bf16.msra.mxu0 %v1558
    %2258 = vmatpush.bf16.msra.mxu0 %v1554
    %2259 = vmatpush.bf16.msra.mxu0 %v1550
    %2260 = vmatpush.bf16.msra.mxu0 %v1546
    %2261 = vmatmul.bf16.gmra.mxu0 %v315
    %v2262 = vpop.f32.mrf.mxu0
    %v2263 = vadd.f32 %v2250, %v2262
    %v2264 = vpop.f32.mrf.mxu0
    %2265 = vdwg.mxu0
    %2266 = vmatpush.bf16.msra.mxu0 %v1606
    %2267 = vmatpush.bf16.msra.mxu0 %v1602
    %2268 = vmatpush.bf16.msra.mxu0 %v1598
    %2269 = vmatpush.bf16.msra.mxu0 %v1594
    %2270 = vmatpush.bf16.msra.mxu0 %v1590
    %2271 = vmatpush.bf16.msra.mxu0 %v1586
    %2272 = vmatpush.bf16.msra.mxu0 %v1582
    %2273 = vmatpush.bf16.msra.mxu0 %v1578
    %2274 = vmatmul.bf16.gmra.mxu0 %v316
    %v2275 = vpop.f32.mrf.mxu0
    %v2276 = vadd.f32 %v2263, %v2275
    %v2277 = vpop.f32.mrf.mxu0
    %2278 = vdwg.mxu0
    %vm2279 = vcmp.ge.f32.partialorder %v1964, 0.0
    %vm2280 = vcmp.ge.f32.partialorder %v2068, 0.0
    %vm2281 = vcmp.ge.f32.partialorder %v2172, 0.0
    %vm2282 = vcmp.ge.f32.partialorder %v2276, 0.0
    %v2283 = vstv %s37
    %v2284 = vmul.f32 %v2283, %v1964
    %v2285 = vmul.f32 %v2283, %v2068
    %v2286 = vmul.f32 %v2283, %v2172
    %v2287 = vmul.f32 %v2283, %v2276
    %v2288 = vsel %vm2279, %v1964, %v2284
    %v2289 = vsel %vm2280, %v2068, %v2285
    %v2290 = vsel %vm2281, %v2172, %v2286
    %v2291 = vsel %vm2282, %v2276, %v2287
    %v2292 = vld [vmem:[%s5] sm:$0xf]
    %v2294 = vperm.slane %v2292, 0
    %v2295 = vperm.slane %v2292, 1
    %v2296 = vperm.slane %v2292, 2
    %v2297 = vperm.slane %v2292, 3
    %v2302 = vmul.f32 %v2288, %v2294
    %v2303 = vmul.f32 %v2289, %v2295
    %v2304 = vmul.f32 %v2290, %v2296
    %v2305 = vmul.f32 %v2291, %v2297
    %vm2306 = vcmask 1041408
    %v2307 = vsel %vm2306, %v2302, 0.0
    %v2308 = vsel %vm2306, %v2303, 0.0
    %v2309 = vadd.f32 %v2307, %v2308
    %v2310 = vsel %vm2306, %v2304, 0.0
    %v2311 = vadd.f32 %v2309, %v2310
    %v2312 = vsel %vm2306, %v2305, 0.0
    %v2313 = vadd.f32 %v2311, %v2312
    %2314 = vadd.xlane.f32.xlu0 %v2313
    %v2315 = vpop.xlane.xlu0 %2314
    %v2316 = vstv %s38
    %v2317 = vadd.f32 %v2315, %v2316
    %2318 = vst [vmem:[%s6] sm:$0x3] %v2317
    // Predicated region
    $region30: #{discriminator_forward.1} parent=1 // pred_check
      _
    $region31: #{discriminator_forward.1} parent=1 // pred_check_branch
      %2320 = sbr.rel (0) target = $region33
    $region32: #{discriminator_forward.1} parent=1 // pred_region
      _
    $region33: #{discriminator_forward.1} parent=1 // pred_fallthru
      _
    // Predicated region
    $region34: #{discriminator_forward.1} parent=1 // pred_check
      _
    $region35: #{discriminator_forward.1} parent=1 // pred_check_branch
      %2322 = sbr.rel (0) target = $region37
    $region36: #{discriminator_forward.1} parent=1 // pred_region
      _
    $region37: #{discriminator_forward.1} parent=1 // pred_fallthru
      _
    %2323 = vsyncpa [#allocation3], 1

</llo_original>
